<compile_context>
chip_gen: v7x
topology: tpu7x:2x2x1
jax: 0.10.0
libtpu: 0.0.40
codegen_flags: <defaults>
</compile_context>

<pallas_src>
import functools

import jax
import jax.numpy as jnp
from jax.experimental import pallas as pl
from jax.experimental.pallas import tpu as pltpu


def _layer_norm(v, gamma, beta, eps=1e-5):
    mu = jnp.mean(v, axis=-1, keepdims=True)
    var = jnp.mean(jnp.square(v - mu), axis=-1, keepdims=True)
    return (v - mu) * jax.lax.rsqrt(var + eps) * gamma + beta


def _bca_kernel(x_ref, mem_ref,
                g3_ref, b3_ref,
                wq_ref, bq_ref, wk_ref, bk_ref, wv_ref, bv_ref, wo_ref, bo_ref,
                g4_ref, b4_ref,
                w1_ref, b1_ref, w2_ref, b2_ref,
                gf_ref, bf_ref,
                o_ref,
                *, num_heads, dim_k, dim_v):
    f32 = jnp.float32
    x = x_ref[0].astype(f32)      # (Sx, D)  key / value source
    mem = mem_ref[0].astype(f32)  # (Sm, D)  query source

    # rc3: LayerNorm before cross-attention.
    nx = _layer_norm(x, g3_ref[...].astype(f32), b3_ref[...].astype(f32))

    # Projections (MXU, f32 accumulation).
    q = jnp.dot(mem, wq_ref[...], preferred_element_type=f32) + bq_ref[...].astype(f32)
    k = jnp.dot(nx, wk_ref[...], preferred_element_type=f32) + bk_ref[...].astype(f32)
    v = jnp.dot(nx, wv_ref[...], preferred_element_type=f32) + bv_ref[...].astype(f32)

    scale = 1.0 / (dim_k ** 0.5)
    acc = jnp.zeros((mem.shape[0], o_ref.shape[-1]), f32)   # (Sm, D)
    # TODO(synk): memory_mask (additive mask on the attention scores) is not
    # implemented; the module's forward is exercised with memory_mask=None.
    for h in range(num_heads):
        qh = q[:, h * dim_k:(h + 1) * dim_k]                 # (Sm, dk)
        kh = k[:, h * dim_k:(h + 1) * dim_k]                 # (Sx, dk)
        vh = v[:, h * dim_v:(h + 1) * dim_v]                 # (Sx, dv)
        s = jax.lax.dot_general(qh, kh, (((1,), (1,)), ((), ())),
                                preferred_element_type=f32) * scale   # (Sm, Sx)
        m = jnp.max(s, axis=-1, keepdims=True)
        p = jnp.exp(s - m)
        a = p / jnp.sum(p, axis=-1, keepdims=True)
        ch = jnp.dot(a, vh, preferred_element_type=f32)      # (Sm, dv)
        # Fold the output projection per head: ctx_h @ Wo[h*dv:(h+1)*dv, :].
        acc = acc + jnp.dot(ch, wo_ref[h * dim_v:(h + 1) * dim_v, :],
                            preferred_element_type=f32)
    attn_out = acc + bo_ref[...].astype(f32)                  # (Sm, D)

    # rc4: LayerNorm + position-wise feed-forward (ReLU).
    n2 = _layer_norm(attn_out, g4_ref[...].astype(f32), b4_ref[...].astype(f32))
    hdn = jnp.maximum(
        jnp.dot(n2, w1_ref[...], preferred_element_type=f32) + b1_ref[...].astype(f32),
        0.0)
    ff = jnp.dot(hdn, w2_ref[...], preferred_element_type=f32) + b2_ref[...].astype(f32)

    # Final LayerNorm.
    out = _layer_norm(ff, gf_ref[...].astype(f32), bf_ref[...].astype(f32))
    o_ref[0] = out.astype(o_ref.dtype)


@functools.partial(jax.jit, static_argnames=("num_heads", "dim_k", "dim_v"))
def backward_cross_attention(x, memory_x, params, *, num_heads, dim_k, dim_v):
    """x: [B, Sx, D] (key/value source), memory_x: [B, Sm, D] (query source)."""
    B, Sx, D = x.shape
    Bm, Sm, Dm = memory_x.shape
    assert B == Bm and D == Dm
    param_list = list(params)

    def const_spec(a):
        n = a.ndim
        return pl.BlockSpec(a.shape, lambda b, _n=n: (0,) * _n)

    x_spec = pl.BlockSpec((1, Sx, D), lambda b: (b, 0, 0))
    mem_spec = pl.BlockSpec((1, Sm, D), lambda b: (b, 0, 0))
    out_spec = pl.BlockSpec((1, Sm, D), lambda b: (b, 0, 0))

    kernel = functools.partial(_bca_kernel, num_heads=num_heads,
                               dim_k=dim_k, dim_v=dim_v)

    return pl.pallas_call(
        kernel,
        out_shape=jax.ShapeDtypeStruct((B, Sm, D), x.dtype),
        grid_spec=pltpu.PrefetchScalarGridSpec(
            num_scalar_prefetch=0,
            grid=(B,),
            in_specs=[x_spec, mem_spec] + [const_spec(p) for p in param_list],
            out_specs=out_spec,
        ),
        compiler_params=pltpu.CompilerParams(
            dimension_semantics=("parallel",),
        ),
    )(x, memory_x, *param_list)


def init_params(key, dim_model, dim_k, dim_v, num_heads, dim_ff, dtype=jnp.float32):
    """nn.Linear-style init (uniform +/- 1/sqrt(fan_in)); LN params perturbed."""
    ks = jax.random.split(key, 9)

    def linear(k, fan_in, fan_out):
        kw, kb = jax.random.split(k)
        bound = 1.0 / (fan_in ** 0.5)
        w = jax.random.uniform(kw, (fan_in, fan_out), dtype, -bound, bound)
        b = jax.random.uniform(kb, (1, fan_out), dtype, -bound, bound)
        return w, b

    def ln_params(k):
        kg, kb = jax.random.split(k)
        g = 1.0 + 0.1 * jax.random.normal(kg, (1, dim_model), dtype)
        b = 0.1 * jax.random.normal(kb, (1, dim_model), dtype)
        return g, b

    wq, bq = linear(ks[0], dim_model, num_heads * dim_k)
    wk, bk = linear(ks[1], dim_model, num_heads * dim_k)
    wv, bv = linear(ks[2], dim_model, num_heads * dim_v)
    wo, bo = linear(ks[3], num_heads * dim_v, dim_model)
    w1, b1 = linear(ks[4], dim_model, dim_ff)
    w2, b2 = linear(ks[5], dim_ff, dim_model)
    g3, b3 = ln_params(ks[6])
    g4, b4 = ln_params(ks[7])
    gf, bf = ln_params(ks[8])
    return (g3, b3, wq, bq, wk, bk, wv, bv, wo, bo, g4, b4, w1, b1, w2, b2, gf, bf)


def reference(x, memory_x, params, num_heads, dim_k, dim_v):
    """Pure-JAX reference mirroring the PyTorch forward (eval mode)."""
    (g3, b3, wq, bq, wk, bk, wv, bv, wo, bo,
     g4, b4, w1, b1, w2, b2, gf, bf) = params

    def ln(v, g, b, eps=1e-5):
        mu = jnp.mean(v, axis=-1, keepdims=True)
        var = jnp.mean(jnp.square(v - mu), axis=-1, keepdims=True)
        return (v - mu) * jax.lax.rsqrt(var + eps) * g + b

    nx = ln(x, g3, b3)
    q = memory_x @ wq + bq
    k = nx @ wk + bk
    v = nx @ wv + bv
    B, Sm, _ = q.shape
    Sx = k.shape[1]
    qh = q.reshape(B, Sm, num_heads, dim_k).transpose(0, 2, 1, 3)
    kh = k.reshape(B, Sx, num_heads, dim_k).transpose(0, 2, 1, 3)
    vh = v.reshape(B, Sx, num_heads, dim_v).transpose(0, 2, 1, 3)
    s = jnp.einsum('bhqd,bhkd->bhqk', qh, kh) / (dim_k ** 0.5)
    a = jax.nn.softmax(s, axis=-1)
    ctx = jnp.einsum('bhqk,bhkd->bhqd', a, vh).transpose(0, 2, 1, 3)
    ctx = ctx.reshape(B, Sm, num_heads * dim_v)
    attn_out = ctx @ wo + bo
    n2 = ln(attn_out, g4, b4)
    ff = jax.nn.relu(n2 @ w1 + b1) @ w2 + b2
    return ln(ff, gf, bf)


if __name__ == "__main__":
    batch, seq_x, seq_mem = 2, 8, 16
    dim_model, dim_k, dim_v, num_heads, dim_ff = 32, 8, 8, 4, 64

    key = jax.random.PRNGKey(0)
    kx, km, kp = jax.random.split(key, 3)
    x = jax.random.normal(kx, (batch, seq_x, dim_model), jnp.float32)
    memory_x = jax.random.normal(km, (batch, seq_mem, dim_model), jnp.float32)
    params = init_params(kp, dim_model, dim_k, dim_v, num_heads, dim_ff)

    out = backward_cross_attention(x, memory_x, params,
                                   num_heads=num_heads, dim_k=dim_k, dim_v=dim_v)
    out = jax.block_until_ready(out)

    ref = reference(x, memory_x, params, num_heads, dim_k, dim_v)
    assert out.shape == (batch, seq_mem, dim_model), out.shape
    assert jnp.allclose(out, ref, atol=1e-4, rtol=1e-4), \
        float(jnp.max(jnp.abs(out - ref)))

    print("KERNEL_OK")
</pallas_src>

<mosaic_0001>
module attributes {stable_mosaic.version = 11 : i64} {
  func.func @_bca_kernel(%arg0: i32, %arg1: memref<1x8x32xf32, #tpu.memory_space<vmem>>, %arg2: memref<1x16x32xf32, #tpu.memory_space<vmem>>, %arg3: memref<1x32xf32, #tpu.memory_space<vmem>>, %arg4: memref<1x32xf32, #tpu.memory_space<vmem>>, %arg5: memref<32x32xf32, #tpu.memory_space<vmem>>, %arg6: memref<1x32xf32, #tpu.memory_space<vmem>>, %arg7: memref<32x32xf32, #tpu.memory_space<vmem>>, %arg8: memref<1x32xf32, #tpu.memory_space<vmem>>, %arg9: memref<32x32xf32, #tpu.memory_space<vmem>>, %arg10: memref<1x32xf32, #tpu.memory_space<vmem>>, %arg11: memref<32x32xf32, #tpu.memory_space<vmem>>, %arg12: memref<1x32xf32, #tpu.memory_space<vmem>>, %arg13: memref<1x32xf32, #tpu.memory_space<vmem>>, %arg14: memref<1x32xf32, #tpu.memory_space<vmem>>, %arg15: memref<32x64xf32, #tpu.memory_space<vmem>>, %arg16: memref<1x64xf32, #tpu.memory_space<vmem>>, %arg17: memref<64x32xf32, #tpu.memory_space<vmem>>, %arg18: memref<1x32xf32, #tpu.memory_space<vmem>>, %arg19: memref<1x32xf32, #tpu.memory_space<vmem>>, %arg20: memref<1x32xf32, #tpu.memory_space<vmem>>, %arg21: memref<1x16x32xf32, #tpu.memory_space<vmem>>) attributes {dimension_semantics = [#tpu.dimension_semantics<parallel>], iteration_bounds = array<i64: 2>, scalar_prefetch = 0 : i64, scratch_operands = 0 : i64, tpu.core_type = #tpu.core_type<tc>, window_params = [{transform_indices = @transform_0, window_bounds = array<i64: 1, 8, 32>}, {transform_indices = @transform_1, window_bounds = array<i64: 1, 16, 32>}, {pipeline_mode = #tpu.pipeline_mode<synchronous>, transform_indices = @transform_2, window_bounds = array<i64: 1, 32>}, {pipeline_mode = #tpu.pipeline_mode<synchronous>, transform_indices = @transform_3, window_bounds = array<i64: 1, 32>}, {pipeline_mode = #tpu.pipeline_mode<synchronous>, transform_indices = @transform_4, window_bounds = array<i64: 32, 32>}, {pipeline_mode = #tpu.pipeline_mode<synchronous>, transform_indices = @transform_5, window_bounds = array<i64: 1, 32>}, {pipeline_mode = #tpu.pipeline_mode<synchronous>, transform_indices = @transform_6, window_bounds = array<i64: 32, 32>}, {pipeline_mode = #tpu.pipeline_mode<synchronous>, transform_indices = @transform_7, window_bounds = array<i64: 1, 32>}, {pipeline_mode = #tpu.pipeline_mode<synchronous>, transform_indices = @transform_8, window_bounds = array<i64: 32, 32>}, {pipeline_mode = #tpu.pipeline_mode<synchronous>, transform_indices = @transform_9, window_bounds = array<i64: 1, 32>}, {pipeline_mode = #tpu.pipeline_mode<synchronous>, transform_indices = @transform_10, window_bounds = array<i64: 32, 32>}, {pipeline_mode = #tpu.pipeline_mode<synchronous>, transform_indices = @transform_11, window_bounds = array<i64: 1, 32>}, {pipeline_mode = #tpu.pipeline_mode<synchronous>, transform_indices = @transform_12, window_bounds = array<i64: 1, 32>}, {pipeline_mode = #tpu.pipeline_mode<synchronous>, transform_indices = @transform_13, window_bounds = array<i64: 1, 32>}, {pipeline_mode = #tpu.pipeline_mode<synchronous>, transform_indices = @transform_14, window_bounds = array<i64: 32, 64>}, {pipeline_mode = #tpu.pipeline_mode<synchronous>, transform_indices = @transform_15, window_bounds = array<i64: 1, 64>}, {pipeline_mode = #tpu.pipeline_mode<synchronous>, transform_indices = @transform_16, window_bounds = array<i64: 64, 32>}, {pipeline_mode = #tpu.pipeline_mode<synchronous>, transform_indices = @transform_17, window_bounds = array<i64: 1, 32>}, {pipeline_mode = #tpu.pipeline_mode<synchronous>, transform_indices = @transform_18, window_bounds = array<i64: 1, 32>}, {pipeline_mode = #tpu.pipeline_mode<synchronous>, transform_indices = @transform_19, window_bounds = array<i64: 1, 32>}, {transform_indices = @transform_20, window_bounds = array<i64: 1, 16, 32>}]} {
    %c0 = arith.constant 0 : index
    %c0_0 = arith.constant 0 : index
    %c0_1 = arith.constant 0 : index
    %0 = vector.load %arg1[%c0, %c0_0, %c0_1] : memref<1x8x32xf32, #tpu.memory_space<vmem>>, vector<1x8x32xf32>
    %1 = vector.shape_cast %0 : vector<1x8x32xf32> to vector<8x32xf32>
    %c0_2 = arith.constant 0 : index
    %c0_3 = arith.constant 0 : index
    %c0_4 = arith.constant 0 : index
    %2 = vector.load %arg2[%c0_2, %c0_3, %c0_4] : memref<1x16x32xf32, #tpu.memory_space<vmem>>, vector<1x16x32xf32>
    %3 = vector.shape_cast %2 : vector<1x16x32xf32> to vector<16x32xf32>
    %c0_5 = arith.constant 0 : index
    %c0_6 = arith.constant 0 : index
    %4 = vector.load %arg3[%c0_5, %c0_6] : memref<1x32xf32, #tpu.memory_space<vmem>>, vector<1x32xf32>
    %c0_7 = arith.constant 0 : index
    %c0_8 = arith.constant 0 : index
    %5 = vector.load %arg4[%c0_7, %c0_8] : memref<1x32xf32, #tpu.memory_space<vmem>>, vector<1x32xf32>
    %cst = arith.constant dense<0.000000e+00> : vector<8xf32>
    %6 = vector.multi_reduction <add>, %1, %cst [1] : vector<8x32xf32> to vector<8xf32>
    %7 = vector.shape_cast %6 : vector<8xf32> to vector<8x1xf32>
    %cst_9 = arith.constant 3.200000e+01 : f32
    %8 = vector.broadcast %cst_9 : f32 to vector<8x1xf32>
    %9 = arith.divf %7, %8 : vector<8x1xf32>
    %10 = vector.broadcast %9 : vector<8x1xf32> to vector<8x32xf32>
    %11 = arith.subf %1, %10 : vector<8x32xf32>
    %12 = arith.mulf %11, %11 : vector<8x32xf32>
    %cst_10 = arith.constant dense<0.000000e+00> : vector<8xf32>
    %13 = vector.multi_reduction <add>, %12, %cst_10 [1] : vector<8x32xf32> to vector<8xf32>
    %14 = vector.shape_cast %13 : vector<8xf32> to vector<8x1xf32>
    %cst_11 = arith.constant 3.200000e+01 : f32
    %15 = vector.broadcast %cst_11 : f32 to vector<8x1xf32>
    %16 = arith.divf %14, %15 : vector<8x1xf32>
    %17 = vector.broadcast %9 : vector<8x1xf32> to vector<8x32xf32>
    %18 = arith.subf %1, %17 : vector<8x32xf32>
    %cst_12 = arith.constant 9.99999974E-6 : f32
    %19 = vector.broadcast %cst_12 : f32 to vector<8x1xf32>
    %20 = arith.addf %16, %19 : vector<8x1xf32>
    %21 = math.rsqrt %20 : vector<8x1xf32>
    %22 = vector.broadcast %21 : vector<8x1xf32> to vector<8x32xf32>
    %23 = arith.mulf %18, %22 : vector<8x32xf32>
    %24 = vector.broadcast %4 : vector<1x32xf32> to vector<8x32xf32>
    %25 = arith.mulf %23, %24 : vector<8x32xf32>
    %26 = vector.broadcast %5 : vector<1x32xf32> to vector<8x32xf32>
    %27 = arith.addf %25, %26 : vector<8x32xf32>
    %c0_13 = arith.constant 0 : index
    %c0_14 = arith.constant 0 : index
    %28 = vector.load %arg5[%c0_13, %c0_14] : memref<32x32xf32, #tpu.memory_space<vmem>>, vector<32x32xf32>
    %cst_15 = arith.constant dense<0.000000e+00> : vector<16x32xf32>
    %29 = tpu.matmul %3, %28, %cst_15 {dimension_numbers = #tpu.dot_dimension_numbers<[1], [0], [0], [1], [0, 0, 1, 1], [], []>} : vector<16x32xf32>, vector<32x32xf32>, vector<16x32xf32> -> vector<16x32xf32>
    %c0_16 = arith.constant 0 : index
    %c0_17 = arith.constant 0 : index
    %30 = vector.load %arg6[%c0_16, %c0_17] : memref<1x32xf32, #tpu.memory_space<vmem>>, vector<1x32xf32>
    %31 = vector.broadcast %30 : vector<1x32xf32> to vector<16x32xf32>
    %32 = arith.addf %29, %31 : vector<16x32xf32>
    %c0_18 = arith.constant 0 : index
    %c0_19 = arith.constant 0 : index
    %33 = vector.load %arg7[%c0_18, %c0_19] : memref<32x32xf32, #tpu.memory_space<vmem>>, vector<32x32xf32>
    %cst_20 = arith.constant dense<0.000000e+00> : vector<8x32xf32>
    %34 = tpu.matmul %27, %33, %cst_20 {dimension_numbers = #tpu.dot_dimension_numbers<[1], [0], [0], [1], [0, 0, 1, 1], [], []>} : vector<8x32xf32>, vector<32x32xf32>, vector<8x32xf32> -> vector<8x32xf32>
    %c0_21 = arith.constant 0 : index
    %c0_22 = arith.constant 0 : index
    %35 = vector.load %arg8[%c0_21, %c0_22] : memref<1x32xf32, #tpu.memory_space<vmem>>, vector<1x32xf32>
    %36 = vector.broadcast %35 : vector<1x32xf32> to vector<8x32xf32>
    %37 = arith.addf %34, %36 : vector<8x32xf32>
    %c0_23 = arith.constant 0 : index
    %c0_24 = arith.constant 0 : index
    %38 = vector.load %arg9[%c0_23, %c0_24] : memref<32x32xf32, #tpu.memory_space<vmem>>, vector<32x32xf32>
    %cst_25 = arith.constant dense<0.000000e+00> : vector<8x32xf32>
    %39 = tpu.matmul %27, %38, %cst_25 {dimension_numbers = #tpu.dot_dimension_numbers<[1], [0], [0], [1], [0, 0, 1, 1], [], []>} : vector<8x32xf32>, vector<32x32xf32>, vector<8x32xf32> -> vector<8x32xf32>
    %c0_26 = arith.constant 0 : index
    %c0_27 = arith.constant 0 : index
    %40 = vector.load %arg10[%c0_26, %c0_27] : memref<1x32xf32, #tpu.memory_space<vmem>>, vector<1x32xf32>
    %41 = vector.broadcast %40 : vector<1x32xf32> to vector<8x32xf32>
    %42 = arith.addf %39, %41 : vector<8x32xf32>
    %cst_28 = arith.constant 0.000000e+00 : f32
    %43 = vector.broadcast %cst_28 : f32 to vector<16x32xf32>
    %44 = vector.extract_strided_slice %32 {offsets = [0, 0], sizes = [16, 8], strides = [1, 1]} : vector<16x32xf32> to vector<16x8xf32>
    %45 = vector.extract_strided_slice %37 {offsets = [0, 0], sizes = [8, 8], strides = [1, 1]} : vector<8x32xf32> to vector<8x8xf32>
    %46 = vector.extract_strided_slice %42 {offsets = [0, 0], sizes = [8, 8], strides = [1, 1]} : vector<8x32xf32> to vector<8x8xf32>
    %cst_29 = arith.constant dense<0.000000e+00> : vector<16x8xf32>
    %47 = tpu.matmul %44, %45, %cst_29 {dimension_numbers = #tpu.dot_dimension_numbers<[1], [1], [0], [0], [0, 0, 1, 0], [], []>} : vector<16x8xf32>, vector<8x8xf32>, vector<16x8xf32> -> vector<16x8xf32>
    %cst_30 = arith.constant 0.353553385 : f32
    %48 = vector.broadcast %cst_30 : f32 to vector<16x8xf32>
    %49 = arith.mulf %47, %48 : vector<16x8xf32>
    %cst_31 = arith.constant dense<0xFF800000> : vector<16xf32>
    %50 = vector.multi_reduction <maximumf>, %49, %cst_31 [1] : vector<16x8xf32> to vector<16xf32>
    %51 = vector.shape_cast %50 : vector<16xf32> to vector<16x1xf32>
    %52 = vector.broadcast %51 : vector<16x1xf32> to vector<16x8xf32>
    %53 = arith.subf %49, %52 : vector<16x8xf32>
    %54 = math.exp %53 : vector<16x8xf32>
    %cst_32 = arith.constant dense<0.000000e+00> : vector<16xf32>
    %55 = vector.multi_reduction <add>, %54, %cst_32 [1] : vector<16x8xf32> to vector<16xf32>
    %56 = vector.shape_cast %55 : vector<16xf32> to vector<16x1xf32>
    %57 = vector.broadcast %56 : vector<16x1xf32> to vector<16x8xf32>
    %58 = arith.divf %54, %57 : vector<16x8xf32>
    %cst_33 = arith.constant dense<0.000000e+00> : vector<16x8xf32>
    %59 = tpu.matmul %58, %46, %cst_33 {dimension_numbers = #tpu.dot_dimension_numbers<[1], [0], [0], [1], [0, 0, 1, 1], [], []>} : vector<16x8xf32>, vector<8x8xf32>, vector<16x8xf32> -> vector<16x8xf32>
    %c0_34 = arith.constant 0 : index
    %c0_35 = arith.constant 0 : index
    %60 = vector.load %arg11[%c0_34, %c0_35] : memref<32x32xf32, #tpu.memory_space<vmem>>, vector<8x32xf32>
    %cst_36 = arith.constant dense<0.000000e+00> : vector<16x32xf32>
    %61 = tpu.matmul %59, %60, %cst_36 {dimension_numbers = #tpu.dot_dimension_numbers<[1], [0], [0], [1], [0, 0, 1, 1], [], []>} : vector<16x8xf32>, vector<8x32xf32>, vector<16x32xf32> -> vector<16x32xf32>
    %62 = arith.addf %43, %61 : vector<16x32xf32>
    %63 = vector.extract_strided_slice %32 {offsets = [0, 8], sizes = [16, 8], strides = [1, 1]} : vector<16x32xf32> to vector<16x8xf32>
    %64 = vector.extract_strided_slice %37 {offsets = [0, 8], sizes = [8, 8], strides = [1, 1]} : vector<8x32xf32> to vector<8x8xf32>
    %65 = vector.extract_strided_slice %42 {offsets = [0, 8], sizes = [8, 8], strides = [1, 1]} : vector<8x32xf32> to vector<8x8xf32>
    %cst_37 = arith.constant dense<0.000000e+00> : vector<16x8xf32>
    %66 = tpu.matmul %63, %64, %cst_37 {dimension_numbers = #tpu.dot_dimension_numbers<[1], [1], [0], [0], [0, 0, 1, 0], [], []>} : vector<16x8xf32>, vector<8x8xf32>, vector<16x8xf32> -> vector<16x8xf32>
    %cst_38 = arith.constant 0.353553385 : f32
    %67 = vector.broadcast %cst_38 : f32 to vector<16x8xf32>
    %68 = arith.mulf %66, %67 : vector<16x8xf32>
    %cst_39 = arith.constant dense<0xFF800000> : vector<16xf32>
    %69 = vector.multi_reduction <maximumf>, %68, %cst_39 [1] : vector<16x8xf32> to vector<16xf32>
    %70 = vector.shape_cast %69 : vector<16xf32> to vector<16x1xf32>
    %71 = vector.broadcast %70 : vector<16x1xf32> to vector<16x8xf32>
    %72 = arith.subf %68, %71 : vector<16x8xf32>
    %73 = math.exp %72 : vector<16x8xf32>
    %cst_40 = arith.constant dense<0.000000e+00> : vector<16xf32>
    %74 = vector.multi_reduction <add>, %73, %cst_40 [1] : vector<16x8xf32> to vector<16xf32>
    %75 = vector.shape_cast %74 : vector<16xf32> to vector<16x1xf32>
    %76 = vector.broadcast %75 : vector<16x1xf32> to vector<16x8xf32>
    %77 = arith.divf %73, %76 : vector<16x8xf32>
    %cst_41 = arith.constant dense<0.000000e+00> : vector<16x8xf32>
    %78 = tpu.matmul %77, %65, %cst_41 {dimension_numbers = #tpu.dot_dimension_numbers<[1], [0], [0], [1], [0, 0, 1, 1], [], []>} : vector<16x8xf32>, vector<8x8xf32>, vector<16x8xf32> -> vector<16x8xf32>
    %c8 = arith.constant 8 : index
    %c0_42 = arith.constant 0 : index
    %79 = vector.load %arg11[%c8, %c0_42] : memref<32x32xf32, #tpu.memory_space<vmem>>, vector<8x32xf32>
    %cst_43 = arith.constant dense<0.000000e+00> : vector<16x32xf32>
    %80 = tpu.matmul %78, %79, %cst_43 {dimension_numbers = #tpu.dot_dimension_numbers<[1], [0], [0], [1], [0, 0, 1, 1], [], []>} : vector<16x8xf32>, vector<8x32xf32>, vector<16x32xf32> -> vector<16x32xf32>
    %81 = arith.addf %62, %80 : vector<16x32xf32>
    %82 = vector.extract_strided_slice %32 {offsets = [0, 16], sizes = [16, 8], strides = [1, 1]} : vector<16x32xf32> to vector<16x8xf32>
    %83 = vector.extract_strided_slice %37 {offsets = [0, 16], sizes = [8, 8], strides = [1, 1]} : vector<8x32xf32> to vector<8x8xf32>
    %84 = vector.extract_strided_slice %42 {offsets = [0, 16], sizes = [8, 8], strides = [1, 1]} : vector<8x32xf32> to vector<8x8xf32>
    %cst_44 = arith.constant dense<0.000000e+00> : vector<16x8xf32>
    %85 = tpu.matmul %82, %83, %cst_44 {dimension_numbers = #tpu.dot_dimension_numbers<[1], [1], [0], [0], [0, 0, 1, 0], [], []>} : vector<16x8xf32>, vector<8x8xf32>, vector<16x8xf32> -> vector<16x8xf32>
    %cst_45 = arith.constant 0.353553385 : f32
    %86 = vector.broadcast %cst_45 : f32 to vector<16x8xf32>
    %87 = arith.mulf %85, %86 : vector<16x8xf32>
    %cst_46 = arith.constant dense<0xFF800000> : vector<16xf32>
    %88 = vector.multi_reduction <maximumf>, %87, %cst_46 [1] : vector<16x8xf32> to vector<16xf32>
    %89 = vector.shape_cast %88 : vector<16xf32> to vector<16x1xf32>
    %90 = vector.broadcast %89 : vector<16x1xf32> to vector<16x8xf32>
    %91 = arith.subf %87, %90 : vector<16x8xf32>
    %92 = math.exp %91 : vector<16x8xf32>
    %cst_47 = arith.constant dense<0.000000e+00> : vector<16xf32>
    %93 = vector.multi_reduction <add>, %92, %cst_47 [1] : vector<16x8xf32> to vector<16xf32>
    %94 = vector.shape_cast %93 : vector<16xf32> to vector<16x1xf32>
    %95 = vector.broadcast %94 : vector<16x1xf32> to vector<16x8xf32>
    %96 = arith.divf %92, %95 : vector<16x8xf32>
    %cst_48 = arith.constant dense<0.000000e+00> : vector<16x8xf32>
    %97 = tpu.matmul %96, %84, %cst_48 {dimension_numbers = #tpu.dot_dimension_numbers<[1], [0], [0], [1], [0, 0, 1, 1], [], []>} : vector<16x8xf32>, vector<8x8xf32>, vector<16x8xf32> -> vector<16x8xf32>
    %c16 = arith.constant 16 : index
    %c0_49 = arith.constant 0 : index
    %98 = vector.load %arg11[%c16, %c0_49] : memref<32x32xf32, #tpu.memory_space<vmem>>, vector<8x32xf32>
    %cst_50 = arith.constant dense<0.000000e+00> : vector<16x32xf32>
    %99 = tpu.matmul %97, %98, %cst_50 {dimension_numbers = #tpu.dot_dimension_numbers<[1], [0], [0], [1], [0, 0, 1, 1], [], []>} : vector<16x8xf32>, vector<8x32xf32>, vector<16x32xf32> -> vector<16x32xf32>
    %100 = arith.addf %81, %99 : vector<16x32xf32>
    %101 = vector.extract_strided_slice %32 {offsets = [0, 24], sizes = [16, 8], strides = [1, 1]} : vector<16x32xf32> to vector<16x8xf32>
    %102 = vector.extract_strided_slice %37 {offsets = [0, 24], sizes = [8, 8], strides = [1, 1]} : vector<8x32xf32> to vector<8x8xf32>
    %103 = vector.extract_strided_slice %42 {offsets = [0, 24], sizes = [8, 8], strides = [1, 1]} : vector<8x32xf32> to vector<8x8xf32>
    %cst_51 = arith.constant dense<0.000000e+00> : vector<16x8xf32>
    %104 = tpu.matmul %101, %102, %cst_51 {dimension_numbers = #tpu.dot_dimension_numbers<[1], [1], [0], [0], [0, 0, 1, 0], [], []>} : vector<16x8xf32>, vector<8x8xf32>, vector<16x8xf32> -> vector<16x8xf32>
    %cst_52 = arith.constant 0.353553385 : f32
    %105 = vector.broadcast %cst_52 : f32 to vector<16x8xf32>
    %106 = arith.mulf %104, %105 : vector<16x8xf32>
    %cst_53 = arith.constant dense<0xFF800000> : vector<16xf32>
    %107 = vector.multi_reduction <maximumf>, %106, %cst_53 [1] : vector<16x8xf32> to vector<16xf32>
    %108 = vector.shape_cast %107 : vector<16xf32> to vector<16x1xf32>
    %109 = vector.broadcast %108 : vector<16x1xf32> to vector<16x8xf32>
    %110 = arith.subf %106, %109 : vector<16x8xf32>
    %111 = math.exp %110 : vector<16x8xf32>
    %cst_54 = arith.constant dense<0.000000e+00> : vector<16xf32>
    %112 = vector.multi_reduction <add>, %111, %cst_54 [1] : vector<16x8xf32> to vector<16xf32>
    %113 = vector.shape_cast %112 : vector<16xf32> to vector<16x1xf32>
    %114 = vector.broadcast %113 : vector<16x1xf32> to vector<16x8xf32>
    %115 = arith.divf %111, %114 : vector<16x8xf32>
    %cst_55 = arith.constant dense<0.000000e+00> : vector<16x8xf32>
    %116 = tpu.matmul %115, %103, %cst_55 {dimension_numbers = #tpu.dot_dimension_numbers<[1], [0], [0], [1], [0, 0, 1, 1], [], []>} : vector<16x8xf32>, vector<8x8xf32>, vector<16x8xf32> -> vector<16x8xf32>
    %c24 = arith.constant 24 : index
    %c0_56 = arith.constant 0 : index
    %117 = vector.load %arg11[%c24, %c0_56] : memref<32x32xf32, #tpu.memory_space<vmem>>, vector<8x32xf32>
    %cst_57 = arith.constant dense<0.000000e+00> : vector<16x32xf32>
    %118 = tpu.matmul %116, %117, %cst_57 {dimension_numbers = #tpu.dot_dimension_numbers<[1], [0], [0], [1], [0, 0, 1, 1], [], []>} : vector<16x8xf32>, vector<8x32xf32>, vector<16x32xf32> -> vector<16x32xf32>
    %119 = arith.addf %100, %118 : vector<16x32xf32>
    %c0_58 = arith.constant 0 : index
    %c0_59 = arith.constant 0 : index
    %120 = vector.load %arg12[%c0_58, %c0_59] : memref<1x32xf32, #tpu.memory_space<vmem>>, vector<1x32xf32>
    %121 = vector.broadcast %120 : vector<1x32xf32> to vector<16x32xf32>
    %122 = arith.addf %119, %121 : vector<16x32xf32>
    %c0_60 = arith.constant 0 : index
    %c0_61 = arith.constant 0 : index
    %123 = vector.load %arg13[%c0_60, %c0_61] : memref<1x32xf32, #tpu.memory_space<vmem>>, vector<1x32xf32>
    %c0_62 = arith.constant 0 : index
    %c0_63 = arith.constant 0 : index
    %124 = vector.load %arg14[%c0_62, %c0_63] : memref<1x32xf32, #tpu.memory_space<vmem>>, vector<1x32xf32>
    %cst_64 = arith.constant dense<0.000000e+00> : vector<16xf32>
    %125 = vector.multi_reduction <add>, %122, %cst_64 [1] : vector<16x32xf32> to vector<16xf32>
    %126 = vector.shape_cast %125 : vector<16xf32> to vector<16x1xf32>
    %cst_65 = arith.constant 3.200000e+01 : f32
    %127 = vector.broadcast %cst_65 : f32 to vector<16x1xf32>
    %128 = arith.divf %126, %127 : vector<16x1xf32>
    %129 = vector.broadcast %128 : vector<16x1xf32> to vector<16x32xf32>
    %130 = arith.subf %122, %129 : vector<16x32xf32>
    %131 = arith.mulf %130, %130 : vector<16x32xf32>
    %cst_66 = arith.constant dense<0.000000e+00> : vector<16xf32>
    %132 = vector.multi_reduction <add>, %131, %cst_66 [1] : vector<16x32xf32> to vector<16xf32>
    %133 = vector.shape_cast %132 : vector<16xf32> to vector<16x1xf32>
    %cst_67 = arith.constant 3.200000e+01 : f32
    %134 = vector.broadcast %cst_67 : f32 to vector<16x1xf32>
    %135 = arith.divf %133, %134 : vector<16x1xf32>
    %136 = vector.broadcast %128 : vector<16x1xf32> to vector<16x32xf32>
    %137 = arith.subf %122, %136 : vector<16x32xf32>
    %cst_68 = arith.constant 9.99999974E-6 : f32
    %138 = vector.broadcast %cst_68 : f32 to vector<16x1xf32>
    %139 = arith.addf %135, %138 : vector<16x1xf32>
    %140 = math.rsqrt %139 : vector<16x1xf32>
    %141 = vector.broadcast %140 : vector<16x1xf32> to vector<16x32xf32>
    %142 = arith.mulf %137, %141 : vector<16x32xf32>
    %143 = vector.broadcast %123 : vector<1x32xf32> to vector<16x32xf32>
    %144 = arith.mulf %142, %143 : vector<16x32xf32>
    %145 = vector.broadcast %124 : vector<1x32xf32> to vector<16x32xf32>
    %146 = arith.addf %144, %145 : vector<16x32xf32>
    %c0_69 = arith.constant 0 : index
    %c0_70 = arith.constant 0 : index
    %147 = vector.load %arg15[%c0_69, %c0_70] : memref<32x64xf32, #tpu.memory_space<vmem>>, vector<32x64xf32>
    %cst_71 = arith.constant dense<0.000000e+00> : vector<16x64xf32>
    %148 = tpu.matmul %146, %147, %cst_71 {dimension_numbers = #tpu.dot_dimension_numbers<[1], [0], [0], [1], [0, 0, 1, 1], [], []>} : vector<16x32xf32>, vector<32x64xf32>, vector<16x64xf32> -> vector<16x64xf32>
    %c0_72 = arith.constant 0 : index
    %c0_73 = arith.constant 0 : index
    %149 = vector.load %arg16[%c0_72, %c0_73] : memref<1x64xf32, #tpu.memory_space<vmem>>, vector<1x64xf32>
    %150 = vector.broadcast %149 : vector<1x64xf32> to vector<16x64xf32>
    %151 = arith.addf %148, %150 : vector<16x64xf32>
    %cst_74 = arith.constant 0.000000e+00 : f32
    %152 = vector.broadcast %cst_74 : f32 to vector<16x64xf32>
    %153 = arith.maximumf %151, %152 : vector<16x64xf32>
    %c0_75 = arith.constant 0 : index
    %c0_76 = arith.constant 0 : index
    %154 = vector.load %arg17[%c0_75, %c0_76] : memref<64x32xf32, #tpu.memory_space<vmem>>, vector<64x32xf32>
    %cst_77 = arith.constant dense<0.000000e+00> : vector<16x32xf32>
    %155 = tpu.matmul %153, %154, %cst_77 {dimension_numbers = #tpu.dot_dimension_numbers<[1], [0], [0], [1], [0, 0, 1, 1], [], []>} : vector<16x64xf32>, vector<64x32xf32>, vector<16x32xf32> -> vector<16x32xf32>
    %c0_78 = arith.constant 0 : index
    %c0_79 = arith.constant 0 : index
    %156 = vector.load %arg18[%c0_78, %c0_79] : memref<1x32xf32, #tpu.memory_space<vmem>>, vector<1x32xf32>
    %157 = vector.broadcast %156 : vector<1x32xf32> to vector<16x32xf32>
    %158 = arith.addf %155, %157 : vector<16x32xf32>
    %c0_80 = arith.constant 0 : index
    %c0_81 = arith.constant 0 : index
    %159 = vector.load %arg19[%c0_80, %c0_81] : memref<1x32xf32, #tpu.memory_space<vmem>>, vector<1x32xf32>
    %c0_82 = arith.constant 0 : index
    %c0_83 = arith.constant 0 : index
    %160 = vector.load %arg20[%c0_82, %c0_83] : memref<1x32xf32, #tpu.memory_space<vmem>>, vector<1x32xf32>
    %cst_84 = arith.constant dense<0.000000e+00> : vector<16xf32>
    %161 = vector.multi_reduction <add>, %158, %cst_84 [1] : vector<16x32xf32> to vector<16xf32>
    %162 = vector.shape_cast %161 : vector<16xf32> to vector<16x1xf32>
    %cst_85 = arith.constant 3.200000e+01 : f32
    %163 = vector.broadcast %cst_85 : f32 to vector<16x1xf32>
    %164 = arith.divf %162, %163 : vector<16x1xf32>
    %165 = vector.broadcast %164 : vector<16x1xf32> to vector<16x32xf32>
    %166 = arith.subf %158, %165 : vector<16x32xf32>
    %167 = arith.mulf %166, %166 : vector<16x32xf32>
    %cst_86 = arith.constant dense<0.000000e+00> : vector<16xf32>
    %168 = vector.multi_reduction <add>, %167, %cst_86 [1] : vector<16x32xf32> to vector<16xf32>
    %169 = vector.shape_cast %168 : vector<16xf32> to vector<16x1xf32>
    %cst_87 = arith.constant 3.200000e+01 : f32
    %170 = vector.broadcast %cst_87 : f32 to vector<16x1xf32>
    %171 = arith.divf %169, %170 : vector<16x1xf32>
    %172 = vector.broadcast %164 : vector<16x1xf32> to vector<16x32xf32>
    %173 = arith.subf %158, %172 : vector<16x32xf32>
    %cst_88 = arith.constant 9.99999974E-6 : f32
    %174 = vector.broadcast %cst_88 : f32 to vector<16x1xf32>
    %175 = arith.addf %171, %174 : vector<16x1xf32>
    %176 = math.rsqrt %175 : vector<16x1xf32>
    %177 = vector.broadcast %176 : vector<16x1xf32> to vector<16x32xf32>
    %178 = arith.mulf %173, %177 : vector<16x32xf32>
    %179 = vector.broadcast %159 : vector<1x32xf32> to vector<16x32xf32>
    %180 = arith.mulf %178, %179 : vector<16x32xf32>
    %181 = vector.broadcast %160 : vector<1x32xf32> to vector<16x32xf32>
    %182 = arith.addf %180, %181 : vector<16x32xf32>
    %c0_89 = arith.constant 0 : index
    %c0_90 = arith.constant 0 : index
    %c0_91 = arith.constant 0 : index
    %183 = vector.load %arg21[%c0_89, %c0_90, %c0_91] : memref<1x16x32xf32, #tpu.memory_space<vmem>>, vector<1x16x32xf32>
    %184 = vector.shape_cast %183 : vector<1x16x32xf32> to vector<16x32xf32>
    %185 = vector.shape_cast %182 : vector<16x32xf32> to vector<1x16x32xf32>
    tpu.vector_store %arg21[%c0_89, %c0_90, %c0_91], %185 {strides = array<i32>} : memref<1x16x32xf32, #tpu.memory_space<vmem>>, vector<1x16x32xf32>,
    return
  }
  func.func @transform_0(%arg0: i32) -> (i32, i32, i32) {
    %c0_i32 = arith.constant 0 : i32
    %c0_i32_0 = arith.constant 0 : i32
    %c0_i32_1 = arith.constant 0 : i32
    return %arg0, %c0_i32, %c0_i32_0 : i32, i32, i32
  }
  func.func @transform_1(%arg0: i32) -> (i32, i32, i32) {
    %c0_i32 = arith.constant 0 : i32
    %c0_i32_0 = arith.constant 0 : i32
    %c0_i32_1 = arith.constant 0 : i32
    return %arg0, %c0_i32, %c0_i32_0 : i32, i32, i32
  }
  func.func @transform_2(%arg0: i32) -> (i32, i32) {
    %c0_i32 = arith.constant 0 : i32
    %c0_i32_0 = arith.constant 0 : i32
    %c0_i32_1 = arith.constant 0 : i32
    return %c0_i32, %c0_i32_0 : i32, i32
  }
  func.func @transform_3(%arg0: i32) -> (i32, i32) {
    %c0_i32 = arith.constant 0 : i32
    %c0_i32_0 = arith.constant 0 : i32
    %c0_i32_1 = arith.constant 0 : i32
    return %c0_i32, %c0_i32_0 : i32, i32
  }
  func.func @transform_4(%arg0: i32) -> (i32, i32) {
    %c0_i32 = arith.constant 0 : i32
    %c0_i32_0 = arith.constant 0 : i32
    %c0_i32_1 = arith.constant 0 : i32
    return %c0_i32, %c0_i32_0 : i32, i32
  }
  func.func @transform_5(%arg0: i32) -> (i32, i32) {
    %c0_i32 = arith.constant 0 : i32
    %c0_i32_0 = arith.constant 0 : i32
    %c0_i32_1 = arith.constant 0 : i32
    return %c0_i32, %c0_i32_0 : i32, i32
  }
  func.func @transform_6(%arg0: i32) -> (i32, i32) {
    %c0_i32 = arith.constant 0 : i32
    %c0_i32_0 = arith.constant 0 : i32
    %c0_i32_1 = arith.constant 0 : i32
    return %c0_i32, %c0_i32_0 : i32, i32
  }
  func.func @transform_7(%arg0: i32) -> (i32, i32) {
    %c0_i32 = arith.constant 0 : i32
    %c0_i32_0 = arith.constant 0 : i32
    %c0_i32_1 = arith.constant 0 : i32
    return %c0_i32, %c0_i32_0 : i32, i32
  }
  func.func @transform_8(%arg0: i32) -> (i32, i32) {
    %c0_i32 = arith.constant 0 : i32
    %c0_i32_0 = arith.constant 0 : i32
    %c0_i32_1 = arith.constant 0 : i32
    return %c0_i32, %c0_i32_0 : i32, i32
  }
  func.func @transform_9(%arg0: i32) -> (i32, i32) {
    %c0_i32 = arith.constant 0 : i32
    %c0_i32_0 = arith.constant 0 : i32
    %c0_i32_1 = arith.constant 0 : i32
    return %c0_i32, %c0_i32_0 : i32, i32
  }
  func.func @transform_10(%arg0: i32) -> (i32, i32) {
    %c0_i32 = arith.constant 0 : i32
    %c0_i32_0 = arith.constant 0 : i32
    %c0_i32_1 = arith.constant 0 : i32
    return %c0_i32, %c0_i32_0 : i32, i32
  }
  func.func @transform_11(%arg0: i32) -> (i32, i32) {
    %c0_i32 = arith.constant 0 : i32
    %c0_i32_0 = arith.constant 0 : i32
    %c0_i32_1 = arith.constant 0 : i32
    return %c0_i32, %c0_i32_0 : i32, i32
  }
  func.func @transform_12(%arg0: i32) -> (i32, i32) {
    %c0_i32 = arith.constant 0 : i32
    %c0_i32_0 = arith.constant 0 : i32
    %c0_i32_1 = arith.constant 0 : i32
    return %c0_i32, %c0_i32_0 : i32, i32
  }
  func.func @transform_13(%arg0: i32) -> (i32, i32) {
    %c0_i32 = arith.constant 0 : i32
    %c0_i32_0 = arith.constant 0 : i32
    %c0_i32_1 = arith.constant 0 : i32
    return %c0_i32, %c0_i32_0 : i32, i32
  }
  func.func @transform_14(%arg0: i32) -> (i32, i32) {
    %c0_i32 = arith.constant 0 : i32
    %c0_i32_0 = arith.constant 0 : i32
    %c0_i32_1 = arith.constant 0 : i32
    return %c0_i32, %c0_i32_0 : i32, i32
  }
  func.func @transform_15(%arg0: i32) -> (i32, i32) {
    %c0_i32 = arith.constant 0 : i32
    %c0_i32_0 = arith.constant 0 : i32
    %c0_i32_1 = arith.constant 0 : i32
    return %c0_i32, %c0_i32_0 : i32, i32
  }
  func.func @transform_16(%arg0: i32) -> (i32, i32) {
    %c0_i32 = arith.constant 0 : i32
    %c0_i32_0 = arith.constant 0 : i32
    %c0_i32_1 = arith.constant 0 : i32
    return %c0_i32, %c0_i32_0 : i32, i32
  }
  func.func @transform_17(%arg0: i32) -> (i32, i32) {
    %c0_i32 = arith.constant 0 : i32
    %c0_i32_0 = arith.constant 0 : i32
    %c0_i32_1 = arith.constant 0 : i32
    return %c0_i32, %c0_i32_0 : i32, i32
  }
  func.func @transform_18(%arg0: i32) -> (i32, i32) {
    %c0_i32 = arith.constant 0 : i32
    %c0_i32_0 = arith.constant 0 : i32
    %c0_i32_1 = arith.constant 0 : i32
    return %c0_i32, %c0_i32_0 : i32, i32
  }
  func.func @transform_19(%arg0: i32) -> (i32, i32) {
    %c0_i32 = arith.constant 0 : i32
    %c0_i32_0 = arith.constant 0 : i32
    %c0_i32_1 = arith.constant 0 : i32
    return %c0_i32, %c0_i32_0 : i32, i32
  }
  func.func @transform_20(%arg0: i32) -> (i32, i32, i32) {
    %c0_i32 = arith.constant 0 : i32
    %c0_i32_0 = arith.constant 0 : i32
    %c0_i32_1 = arith.constant 0 : i32
    return %arg0, %c0_i32, %c0_i32_0 : i32, i32, i32
  }
}

</mosaic_0001>

<llo_original>
// kernel: backward_cross_attention.1
$region0: #{backward_cross_attention.1}
  #allocation0 [shape = 'u32[]', space=smem, size = 0x4, offset = 0x4, fixed_abs, tag = 'smem constant byte address 0x4 - core index']
  #allocation1 [shape = 'u32[144,128]{1,0:T(1,128)}', space=vmem, size = 0x12000, scoped, tag = 'internal scratch']
  %s0 = inlined_call_operand.hbm [shape: f32[2,8,32], index: 0, kind: input, shape index: {}]
  %s1 = inlined_call_operand.vmem [shape: f32[2,16,32], index: 1, kind: input, shape index: {}]
  %s2 = inlined_call_operand.vmem [shape: f32[1,32], index: 2, kind: input, shape index: {}]
  %s3 = inlined_call_operand.vmem [shape: f32[1,32], index: 3, kind: input, shape index: {}]
  %s4 = inlined_call_operand.vmem [shape: f32[32,32], index: 4, kind: input, shape index: {}]
  %s5 = inlined_call_operand.vmem [shape: f32[1,32], index: 5, kind: input, shape index: {}]
  %s6 = inlined_call_operand.vmem [shape: f32[32,32], index: 6, kind: input, shape index: {}]
  %s7 = inlined_call_operand.vmem [shape: f32[1,32], index: 7, kind: input, shape index: {}]
  %s8 = inlined_call_operand.hbm [shape: f32[32,32], index: 8, kind: input, shape index: {}]
  %s9 = inlined_call_operand.vmem [shape: f32[1,32], index: 9, kind: input, shape index: {}]
  %s10 = inlined_call_operand.hbm [shape: f32[32,32], index: 10, kind: input, shape index: {}]
  %s11 = inlined_call_operand.vmem [shape: f32[1,32], index: 11, kind: input, shape index: {}]
  %s12 = inlined_call_operand.vmem [shape: f32[1,32], index: 12, kind: input, shape index: {}]
  %s13 = inlined_call_operand.vmem [shape: f32[1,32], index: 13, kind: input, shape index: {}]
  %s14 = inlined_call_operand.hbm [shape: f32[32,64], index: 14, kind: input, shape index: {}]
  %s15 = inlined_call_operand.vmem [shape: f32[1,64], index: 15, kind: input, shape index: {}]
  %s16 = inlined_call_operand.vmem [shape: f32[64,32], index: 16, kind: input, shape index: {}]
  %s17 = inlined_call_operand.vmem [shape: f32[1,32], index: 17, kind: input, shape index: {}]
  %s18 = inlined_call_operand.vmem [shape: f32[1,32], index: 18, kind: input, shape index: {}]
  %s19 = inlined_call_operand.vmem [shape: f32[1,32], index: 19, kind: input, shape index: {}]
  %s20 = inlined_call_operand.hbm [shape: f32[2,16,32], index: 20, kind: output, shape index: {}]
  %s21 = sld [smem:[#allocation0]]
  $region129: #{backward_cross_attention.1} parent=0
    _
  %s23 = ssub.s32 1, %s21
  %s24 = scalar_select 0, %s23, %s21
  $region1: #{backward_cross_attention.1} parent=0
    #allocation2 [shape = 'u8[8192]{0}', space=vmem, size = 0x2000, scoped, tag = 'input window, operand 0']
    #allocation3 [shape = 's32[2]{0}', space=sflag, size = 0x8, scoped, tag = 'scoped memory for backward_cross_attention.1']
    #allocation4 [shape = 's32[2]{0}', space=sflag, size = 0x8, scoped, tag = 'scoped memory for backward_cross_attention.1']
    #allocation5 [shape = 'u8[16384]{0}', space=vmem, size = 0x4000, scoped, tag = 'input window, operand 8, single buffered']
    #allocation6 [shape = 's32[1]{0}', space=sflag, size = 0x4, scoped, tag = 'scoped memory for backward_cross_attention.1']
    #allocation7 [shape = 'u8[16384]{0}', space=vmem, size = 0x4000, scoped, tag = 'input window, operand 10, single buffered']
    #allocation8 [shape = 'u8[16384]{0}', space=vmem, size = 0x4000, scoped, tag = 'input window, operand 14, single buffered']
    #allocation9 [shape = 's32[1]{0}', space=sflag, size = 0x4, scoped, tag = 'scoped memory for backward_cross_attention.1']
    #allocation10 [shape = 'u8[16384]{0}', space=vmem, size = 0x4000, scoped, tag = 'output window, operand 0']
    %25 = vsyncpa [#allocation3], 0
    %s26 = scalar_lea.sflag [#allocation3], 1
    %27 = vsyncpa %s26, 0
    %28 = vsyncpa [#allocation6], 0
    %29 = vsyncpa [#allocation9], 0
    %30 = vsyncpa [#allocation4], 0
    %s31 = scalar_lea.sflag [#allocation4], 1
    %32 = vsyncpa %s31, 0
    loop: start=0, step=1, limit=4
    $region2: #{backward_cross_attention.1} parent=1 // loop_pre_header
      _
    $region3: #{backward_cross_attention.1} parent=1 // loop_header
      %s34 = sphi 0, %s38
      %p35 = scmp.ge.s32.totalorder %s34, 4
      %s44 = sphi 0, %s46
      %s47 = sphi 0, %s44
      %s48 = sphi 0, %s47
      %s64 = sphi 0, %s48
      %s70 = sphi 0, %s72
      %s73 = sphi 0, %s70
      %s74 = sphi 0, %s73
      %s90 = sphi 0, %s74
      %s94 = sphi 0, %s94
      %s96 = sphi 0, %s94
      %s97 = sphi 0, %s96
      %s111 = sphi 0, %s97
      %s115 = sphi 0, %s115
      %s117 = sphi 0, %s115
      %s118 = sphi 0, %s117
      %s132 = sphi 0, %s118
      %s136 = sphi 0, %s136
      %s138 = sphi 0, %s136
      %s139 = sphi 0, %s138
      %s153 = sphi 0, %s139
      %s157 = sphi 0, %s157
      %s159 = sphi 0, %s157
      %s160 = sphi 0, %s159
      %s174 = sphi 0, %s160
      %s178 = sphi 0, %s178
      %s180 = sphi 0, %s178
      %s181 = sphi 0, %s180
      %s195 = sphi 0, %s181
      %s199 = sphi 0, %s199
      %s201 = sphi 0, %s199
      %s202 = sphi 0, %s201
      %s216 = sphi 0, %s202
      %s220 = sphi 0, %s220
      %s222 = sphi 0, %s220
      %s223 = sphi 0, %s222
      %s237 = sphi 0, %s223
      %s241 = sphi 0, %s241
      %s243 = sphi 0, %s241
      %s244 = sphi 0, %s243
      %s258 = sphi 0, %s244
      %s262 = sphi 0, %s262
      %s264 = sphi 0, %s262
      %s265 = sphi 0, %s264
      %s279 = sphi 0, %s265
      %s283 = sphi 0, %s283
      %s285 = sphi 0, %s283
      %s286 = sphi 0, %s285
      %s300 = sphi 0, %s286
      %s304 = sphi 0, %s304
      %s306 = sphi 0, %s304
      %s307 = sphi 0, %s306
      %s321 = sphi 0, %s307
      %s325 = sphi 0, %s325
      %s327 = sphi 0, %s325
      %s328 = sphi 0, %s327
      %s342 = sphi 0, %s328
      %s346 = sphi 0, %s346
      %s348 = sphi 0, %s346
      %s349 = sphi 0, %s348
      %s363 = sphi 0, %s349
      %s367 = sphi 0, %s367
      %s369 = sphi 0, %s367
      %s370 = sphi 0, %s369
      %s384 = sphi 0, %s370
      %s388 = sphi 0, %s388
      %s390 = sphi 0, %s388
      %s391 = sphi 0, %s390
      %s405 = sphi 0, %s391
      %s409 = sphi 0, %s409
      %s411 = sphi 0, %s409
      %s412 = sphi 0, %s411
      %s426 = sphi 0, %s412
      %s430 = sphi 0, %s430
      %s432 = sphi 0, %s430
      %s433 = sphi 0, %s432
      %s447 = sphi 0, %s433
      %s451 = sphi 0, %s451
      %s453 = sphi 0, %s451
      %s454 = sphi 0, %s453
      %s468 = sphi 0, %s454
      %s474 = sphi 0, %s476
      %s477 = sphi 0, %s474
      %s478 = sphi 0, %s477
      %s494 = sphi 0, %s478
    $region4: #{backward_cross_attention.1} parent=1 // loop_header_branch
      %37 = sbr.rel (%p35) target = $region8
    $region5: #{backward_cross_attention.1} parent=1 // loop_body
      %s39 = ssub.s32 %s34, 1
      %s40 = ssub.s32 %s34, 2
      %s41 = sadd.s32 %s34, 1
      %s42 = ssub.s32 %s34, %s41
      %p43 = scmp.eq.s32.totalorder %s42, 0
      %s45 = sadd.s32 %s44, 1
      %s46 = scalar_select %p43, %s44, %s45
      %p49 = pneg %p43
      %p50 = scmp.eq.s32.totalorder %s34, 1
      %p51 = por %p49, %p50
      %p52 = scmp.ne.s32.totalorder %s44, %s47
      %p53 = scmp.eq.s32.totalorder %s34, 0
      %p54 = por %p52, %p53
      %p55 = scmp.ne.s32.totalorder %s44, %s47
      %p56 = scmp.eq.s32.totalorder %s39, 1
      %p57 = por %p55, %p56
      %p58 = scmp.ne.s32.totalorder %s47, %s48
      %p59 = scmp.eq.s32.totalorder %s39, 0
      %p60 = por %p58, %p59
      %p61 = scmp.ne.s32.totalorder %s47, %s48
      %p62 = scmp.eq.s32.totalorder %s40, 1
      %p63 = por %p61, %p62
      %p65 = scmp.ne.s32.totalorder %s48, %s64
      %p66 = scmp.eq.s32.totalorder %s40, 0
      %p67 = por %p65, %p66
      %s68 = ssub.s32 %s34, %s41
      %p69 = scmp.eq.s32.totalorder %s68, 0
      %s71 = sadd.s32 %s70, 1
      %s72 = scalar_select %p69, %s70, %s71
      %p75 = pneg %p69
      %p76 = scmp.eq.s32.totalorder %s34, 1
      %p77 = por %p75, %p76
      %p78 = scmp.ne.s32.totalorder %s70, %s73
      %p79 = scmp.eq.s32.totalorder %s34, 0
      %p80 = por %p78, %p79
      %p81 = scmp.ne.s32.totalorder %s70, %s73
      %p82 = scmp.eq.s32.totalorder %s39, 1
      %p83 = por %p81, %p82
      %p84 = scmp.ne.s32.totalorder %s73, %s74
      %p85 = scmp.eq.s32.totalorder %s39, 0
      %p86 = por %p84, %p85
      %p87 = scmp.ne.s32.totalorder %s73, %s74
      %p88 = scmp.eq.s32.totalorder %s40, 1
      %p89 = por %p87, %p88
      %p91 = scmp.ne.s32.totalorder %s74, %s90
      %p92 = scmp.eq.s32.totalorder %s40, 0
      %p93 = por %p91, %p92
      %s95 = sadd.s32 %s94, 1
      %p98 = scmp.eq.s32.totalorder %s34, 1
      %p99 = scmp.ne.s32.totalorder %s94, %s96
      %p100 = scmp.eq.s32.totalorder %s34, 0
      %p101 = por %p99, %p100
      %p102 = scmp.ne.s32.totalorder %s94, %s96
      %p103 = scmp.eq.s32.totalorder %s39, 1
      %p104 = por %p102, %p103
      %p105 = scmp.ne.s32.totalorder %s96, %s97
      %p106 = scmp.eq.s32.totalorder %s39, 0
      %p107 = por %p105, %p106
      %p108 = scmp.ne.s32.totalorder %s96, %s97
      %p109 = scmp.eq.s32.totalorder %s40, 1
      %p110 = por %p108, %p109
      %p112 = scmp.ne.s32.totalorder %s97, %s111
      %p113 = scmp.eq.s32.totalorder %s40, 0
      %p114 = por %p112, %p113
      %s116 = sadd.s32 %s115, 1
      %p119 = scmp.eq.s32.totalorder %s34, 1
      %p120 = scmp.ne.s32.totalorder %s115, %s117
      %p121 = scmp.eq.s32.totalorder %s34, 0
      %p122 = por %p120, %p121
      %p123 = scmp.ne.s32.totalorder %s115, %s117
      %p124 = scmp.eq.s32.totalorder %s39, 1
      %p125 = por %p123, %p124
      %p126 = scmp.ne.s32.totalorder %s117, %s118
      %p127 = scmp.eq.s32.totalorder %s39, 0
      %p128 = por %p126, %p127
      %p129 = scmp.ne.s32.totalorder %s117, %s118
      %p130 = scmp.eq.s32.totalorder %s40, 1
      %p131 = por %p129, %p130
      %p133 = scmp.ne.s32.totalorder %s118, %s132
      %p134 = scmp.eq.s32.totalorder %s40, 0
      %p135 = por %p133, %p134
      %s137 = sadd.s32 %s136, 1
      %p140 = scmp.eq.s32.totalorder %s34, 1
      %p141 = scmp.ne.s32.totalorder %s136, %s138
      %p142 = scmp.eq.s32.totalorder %s34, 0
      %p143 = por %p141, %p142
      %p144 = scmp.ne.s32.totalorder %s136, %s138
      %p145 = scmp.eq.s32.totalorder %s39, 1
      %p146 = por %p144, %p145
      %p147 = scmp.ne.s32.totalorder %s138, %s139
      %p148 = scmp.eq.s32.totalorder %s39, 0
      %p149 = por %p147, %p148
      %p150 = scmp.ne.s32.totalorder %s138, %s139
      %p151 = scmp.eq.s32.totalorder %s40, 1
      %p152 = por %p150, %p151
      %p154 = scmp.ne.s32.totalorder %s139, %s153
      %p155 = scmp.eq.s32.totalorder %s40, 0
      %p156 = por %p154, %p155
      %s158 = sadd.s32 %s157, 1
      %p161 = scmp.eq.s32.totalorder %s34, 1
      %p162 = scmp.ne.s32.totalorder %s157, %s159
      %p163 = scmp.eq.s32.totalorder %s34, 0
      %p164 = por %p162, %p163
      %p165 = scmp.ne.s32.totalorder %s157, %s159
      %p166 = scmp.eq.s32.totalorder %s39, 1
      %p167 = por %p165, %p166
      %p168 = scmp.ne.s32.totalorder %s159, %s160
      %p169 = scmp.eq.s32.totalorder %s39, 0
      %p170 = por %p168, %p169
      %p171 = scmp.ne.s32.totalorder %s159, %s160
      %p172 = scmp.eq.s32.totalorder %s40, 1
      %p173 = por %p171, %p172
      %p175 = scmp.ne.s32.totalorder %s160, %s174
      %p176 = scmp.eq.s32.totalorder %s40, 0
      %p177 = por %p175, %p176
      %s179 = sadd.s32 %s178, 1
      %p182 = scmp.eq.s32.totalorder %s34, 1
      %p183 = scmp.ne.s32.totalorder %s178, %s180
      %p184 = scmp.eq.s32.totalorder %s34, 0
      %p185 = por %p183, %p184
      %p186 = scmp.ne.s32.totalorder %s178, %s180
      %p187 = scmp.eq.s32.totalorder %s39, 1
      %p188 = por %p186, %p187
      %p189 = scmp.ne.s32.totalorder %s180, %s181
      %p190 = scmp.eq.s32.totalorder %s39, 0
      %p191 = por %p189, %p190
      %p192 = scmp.ne.s32.totalorder %s180, %s181
      %p193 = scmp.eq.s32.totalorder %s40, 1
      %p194 = por %p192, %p193
      %p196 = scmp.ne.s32.totalorder %s181, %s195
      %p197 = scmp.eq.s32.totalorder %s40, 0
      %p198 = por %p196, %p197
      %s200 = sadd.s32 %s199, 1
      %p203 = scmp.eq.s32.totalorder %s34, 1
      %p204 = scmp.ne.s32.totalorder %s199, %s201
      %p205 = scmp.eq.s32.totalorder %s34, 0
      %p206 = por %p204, %p205
      %p207 = scmp.ne.s32.totalorder %s199, %s201
      %p208 = scmp.eq.s32.totalorder %s39, 1
      %p209 = por %p207, %p208
      %p210 = scmp.ne.s32.totalorder %s201, %s202
      %p211 = scmp.eq.s32.totalorder %s39, 0
      %p212 = por %p210, %p211
      %p213 = scmp.ne.s32.totalorder %s201, %s202
      %p214 = scmp.eq.s32.totalorder %s40, 1
      %p215 = por %p213, %p214
      %p217 = scmp.ne.s32.totalorder %s202, %s216
      %p218 = scmp.eq.s32.totalorder %s40, 0
      %p219 = por %p217, %p218
      %s221 = sadd.s32 %s220, 1
      %p224 = scmp.eq.s32.totalorder %s34, 1
      %p225 = scmp.ne.s32.totalorder %s220, %s222
      %p226 = scmp.eq.s32.totalorder %s34, 0
      %p227 = por %p225, %p226
      %p228 = scmp.ne.s32.totalorder %s220, %s222
      %p229 = scmp.eq.s32.totalorder %s39, 1
      %p230 = por %p228, %p229
      %p231 = scmp.ne.s32.totalorder %s222, %s223
      %p232 = scmp.eq.s32.totalorder %s39, 0
      %p233 = por %p231, %p232
      %p234 = scmp.ne.s32.totalorder %s222, %s223
      %p235 = scmp.eq.s32.totalorder %s40, 1
      %p236 = por %p234, %p235
      %p238 = scmp.ne.s32.totalorder %s223, %s237
      %p239 = scmp.eq.s32.totalorder %s40, 0
      %p240 = por %p238, %p239
      %s242 = sadd.s32 %s241, 1
      %p245 = scmp.eq.s32.totalorder %s34, 1
      %p246 = scmp.ne.s32.totalorder %s241, %s243
      %p247 = scmp.eq.s32.totalorder %s34, 0
      %p248 = por %p246, %p247
      %p249 = scmp.ne.s32.totalorder %s241, %s243
      %p250 = scmp.eq.s32.totalorder %s39, 1
      %p251 = por %p249, %p250
      %p252 = scmp.ne.s32.totalorder %s243, %s244
      %p253 = scmp.eq.s32.totalorder %s39, 0
      %p254 = por %p252, %p253
      %p255 = scmp.ne.s32.totalorder %s243, %s244
      %p256 = scmp.eq.s32.totalorder %s40, 1
      %p257 = por %p255, %p256
      %p259 = scmp.ne.s32.totalorder %s244, %s258
      %p260 = scmp.eq.s32.totalorder %s40, 0
      %p261 = por %p259, %p260
      %s263 = sadd.s32 %s262, 1
      %p266 = scmp.eq.s32.totalorder %s34, 1
      %p267 = scmp.ne.s32.totalorder %s262, %s264
      %p268 = scmp.eq.s32.totalorder %s34, 0
      %p269 = por %p267, %p268
      %p270 = scmp.ne.s32.totalorder %s262, %s264
      %p271 = scmp.eq.s32.totalorder %s39, 1
      %p272 = por %p270, %p271
      %p273 = scmp.ne.s32.totalorder %s264, %s265
      %p274 = scmp.eq.s32.totalorder %s39, 0
      %p275 = por %p273, %p274
      %p276 = scmp.ne.s32.totalorder %s264, %s265
      %p277 = scmp.eq.s32.totalorder %s40, 1
      %p278 = por %p276, %p277
      %p280 = scmp.ne.s32.totalorder %s265, %s279
      %p281 = scmp.eq.s32.totalorder %s40, 0
      %p282 = por %p280, %p281
      %s284 = sadd.s32 %s283, 1
      %p287 = scmp.eq.s32.totalorder %s34, 1
      %p288 = scmp.ne.s32.totalorder %s283, %s285
      %p289 = scmp.eq.s32.totalorder %s34, 0
      %p290 = por %p288, %p289
      %p291 = scmp.ne.s32.totalorder %s283, %s285
      %p292 = scmp.eq.s32.totalorder %s39, 1
      %p293 = por %p291, %p292
      %p294 = scmp.ne.s32.totalorder %s285, %s286
      %p295 = scmp.eq.s32.totalorder %s39, 0
      %p296 = por %p294, %p295
      %p297 = scmp.ne.s32.totalorder %s285, %s286
      %p298 = scmp.eq.s32.totalorder %s40, 1
      %p299 = por %p297, %p298
      %p301 = scmp.ne.s32.totalorder %s286, %s300
      %p302 = scmp.eq.s32.totalorder %s40, 0
      %p303 = por %p301, %p302
      %s305 = sadd.s32 %s304, 1
      %p308 = scmp.eq.s32.totalorder %s34, 1
      %p309 = scmp.ne.s32.totalorder %s304, %s306
      %p310 = scmp.eq.s32.totalorder %s34, 0
      %p311 = por %p309, %p310
      %p312 = scmp.ne.s32.totalorder %s304, %s306
      %p313 = scmp.eq.s32.totalorder %s39, 1
      %p314 = por %p312, %p313
      %p315 = scmp.ne.s32.totalorder %s306, %s307
      %p316 = scmp.eq.s32.totalorder %s39, 0
      %p317 = por %p315, %p316
      %p318 = scmp.ne.s32.totalorder %s306, %s307
      %p319 = scmp.eq.s32.totalorder %s40, 1
      %p320 = por %p318, %p319
      %p322 = scmp.ne.s32.totalorder %s307, %s321
      %p323 = scmp.eq.s32.totalorder %s40, 0
      %p324 = por %p322, %p323
      %s326 = sadd.s32 %s325, 1
      %p329 = scmp.eq.s32.totalorder %s34, 1
      %p330 = scmp.ne.s32.totalorder %s325, %s327
      %p331 = scmp.eq.s32.totalorder %s34, 0
      %p332 = por %p330, %p331
      %p333 = scmp.ne.s32.totalorder %s325, %s327
      %p334 = scmp.eq.s32.totalorder %s39, 1
      %p335 = por %p333, %p334
      %p336 = scmp.ne.s32.totalorder %s327, %s328
      %p337 = scmp.eq.s32.totalorder %s39, 0
      %p338 = por %p336, %p337
      %p339 = scmp.ne.s32.totalorder %s327, %s328
      %p340 = scmp.eq.s32.totalorder %s40, 1
      %p341 = por %p339, %p340
      %p343 = scmp.ne.s32.totalorder %s328, %s342
      %p344 = scmp.eq.s32.totalorder %s40, 0
      %p345 = por %p343, %p344
      %s347 = sadd.s32 %s346, 1
      %p350 = scmp.eq.s32.totalorder %s34, 1
      %p351 = scmp.ne.s32.totalorder %s346, %s348
      %p352 = scmp.eq.s32.totalorder %s34, 0
      %p353 = por %p351, %p352
      %p354 = scmp.ne.s32.totalorder %s346, %s348
      %p355 = scmp.eq.s32.totalorder %s39, 1
      %p356 = por %p354, %p355
      %p357 = scmp.ne.s32.totalorder %s348, %s349
      %p358 = scmp.eq.s32.totalorder %s39, 0
      %p359 = por %p357, %p358
      %p360 = scmp.ne.s32.totalorder %s348, %s349
      %p361 = scmp.eq.s32.totalorder %s40, 1
      %p362 = por %p360, %p361
      %p364 = scmp.ne.s32.totalorder %s349, %s363
      %p365 = scmp.eq.s32.totalorder %s40, 0
      %p366 = por %p364, %p365
      %s368 = sadd.s32 %s367, 1
      %p371 = scmp.eq.s32.totalorder %s34, 1
      %p372 = scmp.ne.s32.totalorder %s367, %s369
      %p373 = scmp.eq.s32.totalorder %s34, 0
      %p374 = por %p372, %p373
      %p375 = scmp.ne.s32.totalorder %s367, %s369
      %p376 = scmp.eq.s32.totalorder %s39, 1
      %p377 = por %p375, %p376
      %p378 = scmp.ne.s32.totalorder %s369, %s370
      %p379 = scmp.eq.s32.totalorder %s39, 0
      %p380 = por %p378, %p379
      %p381 = scmp.ne.s32.totalorder %s369, %s370
      %p382 = scmp.eq.s32.totalorder %s40, 1
      %p383 = por %p381, %p382
      %p385 = scmp.ne.s32.totalorder %s370, %s384
      %p386 = scmp.eq.s32.totalorder %s40, 0
      %p387 = por %p385, %p386
      %s389 = sadd.s32 %s388, 1
      %p392 = scmp.eq.s32.totalorder %s34, 1
      %p393 = scmp.ne.s32.totalorder %s388, %s390
      %p394 = scmp.eq.s32.totalorder %s34, 0
      %p395 = por %p393, %p394
      %p396 = scmp.ne.s32.totalorder %s388, %s390
      %p397 = scmp.eq.s32.totalorder %s39, 1
      %p398 = por %p396, %p397
      %p399 = scmp.ne.s32.totalorder %s390, %s391
      %p400 = scmp.eq.s32.totalorder %s39, 0
      %p401 = por %p399, %p400
      %p402 = scmp.ne.s32.totalorder %s390, %s391
      %p403 = scmp.eq.s32.totalorder %s40, 1
      %p404 = por %p402, %p403
      %p406 = scmp.ne.s32.totalorder %s391, %s405
      %p407 = scmp.eq.s32.totalorder %s40, 0
      %p408 = por %p406, %p407
      %s410 = sadd.s32 %s409, 1
      %p413 = scmp.eq.s32.totalorder %s34, 1
      %p414 = scmp.ne.s32.totalorder %s409, %s411
      %p415 = scmp.eq.s32.totalorder %s34, 0
      %p416 = por %p414, %p415
      %p417 = scmp.ne.s32.totalorder %s409, %s411
      %p418 = scmp.eq.s32.totalorder %s39, 1
      %p419 = por %p417, %p418
      %p420 = scmp.ne.s32.totalorder %s411, %s412
      %p421 = scmp.eq.s32.totalorder %s39, 0
      %p422 = por %p420, %p421
      %p423 = scmp.ne.s32.totalorder %s411, %s412
      %p424 = scmp.eq.s32.totalorder %s40, 1
      %p425 = por %p423, %p424
      %p427 = scmp.ne.s32.totalorder %s412, %s426
      %p428 = scmp.eq.s32.totalorder %s40, 0
      %p429 = por %p427, %p428
      %s431 = sadd.s32 %s430, 1
      %p434 = scmp.eq.s32.totalorder %s34, 1
      %p435 = scmp.ne.s32.totalorder %s430, %s432
      %p436 = scmp.eq.s32.totalorder %s34, 0
      %p437 = por %p435, %p436
      %p438 = scmp.ne.s32.totalorder %s430, %s432
      %p439 = scmp.eq.s32.totalorder %s39, 1
      %p440 = por %p438, %p439
      %p441 = scmp.ne.s32.totalorder %s432, %s433
      %p442 = scmp.eq.s32.totalorder %s39, 0
      %p443 = por %p441, %p442
      %p444 = scmp.ne.s32.totalorder %s432, %s433
      %p445 = scmp.eq.s32.totalorder %s40, 1
      %p446 = por %p444, %p445
      %p448 = scmp.ne.s32.totalorder %s433, %s447
      %p449 = scmp.eq.s32.totalorder %s40, 0
      %p450 = por %p448, %p449
      %s452 = sadd.s32 %s451, 1
      %p455 = scmp.eq.s32.totalorder %s34, 1
      %p456 = scmp.ne.s32.totalorder %s451, %s453
      %p457 = scmp.eq.s32.totalorder %s34, 0
      %p458 = por %p456, %p457
      %p459 = scmp.ne.s32.totalorder %s451, %s453
      %p460 = scmp.eq.s32.totalorder %s39, 1
      %p461 = por %p459, %p460
      %p462 = scmp.ne.s32.totalorder %s453, %s454
      %p463 = scmp.eq.s32.totalorder %s39, 0
      %p464 = por %p462, %p463
      %p465 = scmp.ne.s32.totalorder %s453, %s454
      %p466 = scmp.eq.s32.totalorder %s40, 1
      %p467 = por %p465, %p466
      %p469 = scmp.ne.s32.totalorder %s454, %s468
      %p470 = scmp.eq.s32.totalorder %s40, 0
      %p471 = por %p469, %p470
      %s472 = ssub.s32 %s34, %s41
      %p473 = scmp.eq.s32.totalorder %s472, 0
      %s475 = sadd.s32 %s474, 1
      %s476 = scalar_select %p473, %s474, %s475
      %p479 = pneg %p473
      %p480 = scmp.eq.s32.totalorder %s34, 1
      %p481 = por %p479, %p480
      %p482 = scmp.ne.s32.totalorder %s474, %s477
      %p483 = scmp.eq.s32.totalorder %s34, 0
      %p484 = por %p482, %p483
      %p485 = scmp.ne.s32.totalorder %s474, %s477
      %p486 = scmp.eq.s32.totalorder %s39, 1
      %p487 = por %p485, %p486
      %p488 = scmp.ne.s32.totalorder %s477, %s478
      %p489 = scmp.eq.s32.totalorder %s39, 0
      %p490 = por %p488, %p489
      %p491 = scmp.ne.s32.totalorder %s477, %s478
      %p492 = scmp.eq.s32.totalorder %s40, 1
      %p493 = por %p491, %p492
      %p495 = scmp.ne.s32.totalorder %s478, %s494
      %p496 = scmp.eq.s32.totalorder %s40, 0
      %p497 = por %p495, %p496
      %p498 = scmp.le.s32.totalorder 1, %s34
      %p499 = scmp.lt.s32.totalorder %s34, 3
      %p500 = pnand %p498, %p499
      %p501 = pneg %p500
      // Predicated region
      $region9: #{backward_cross_attention.1} parent=5 // pred_check
        _
      $region10: #{backward_cross_attention.1} parent=5 // pred_check_branch
        %503 = sbr.rel (%p500) target = $region12
      $region11: #{backward_cross_attention.1} parent=5 // pred_region
        %s504 = ssub.s32 %s34, 1
        // Predicated region
        $region13: #{backward_cross_attention.1} parent=11 // pred_check
          %p505 = pneg %p107
        $region14: #{backward_cross_attention.1} parent=11 // pred_check_branch
          %507 = sbr.rel (%p505) target = $region16
        $region15: #{backward_cross_attention.1} parent=11 // pred_region
          _
        $region16: #{backward_cross_attention.1} parent=11 // pred_fallthru
          _
        // Predicated region
        $region17: #{backward_cross_attention.1} parent=11 // pred_check
          %p508 = pneg %p128
        $region18: #{backward_cross_attention.1} parent=11 // pred_check_branch
          %510 = sbr.rel (%p508) target = $region20
        $region19: #{backward_cross_attention.1} parent=11 // pred_region
          _
        $region20: #{backward_cross_attention.1} parent=11 // pred_fallthru
          _
        // Predicated region
        $region21: #{backward_cross_attention.1} parent=11 // pred_check
          %p511 = pneg %p149
        $region22: #{backward_cross_attention.1} parent=11 // pred_check_branch
          %513 = sbr.rel (%p511) target = $region24
        $region23: #{backward_cross_attention.1} parent=11 // pred_region
          _
        $region24: #{backward_cross_attention.1} parent=11 // pred_fallthru
          _
        // Predicated region
        $region25: #{backward_cross_attention.1} parent=11 // pred_check
          %p514 = pneg %p170
        $region26: #{backward_cross_attention.1} parent=11 // pred_check_branch
          %516 = sbr.rel (%p514) target = $region28
        $region27: #{backward_cross_attention.1} parent=11 // pred_region
          _
        $region28: #{backward_cross_attention.1} parent=11 // pred_fallthru
          _
        // Predicated region
        $region29: #{backward_cross_attention.1} parent=11 // pred_check
          %p517 = pneg %p191
        $region30: #{backward_cross_attention.1} parent=11 // pred_check_branch
          %519 = sbr.rel (%p517) target = $region32
        $region31: #{backward_cross_attention.1} parent=11 // pred_region
          _
        $region32: #{backward_cross_attention.1} parent=11 // pred_fallthru
          _
        // Predicated region
        $region33: #{backward_cross_attention.1} parent=11 // pred_check
          %p520 = pneg %p212
        $region34: #{backward_cross_attention.1} parent=11 // pred_check_branch
          %522 = sbr.rel (%p520) target = $region36
        $region35: #{backward_cross_attention.1} parent=11 // pred_region
          _
        $region36: #{backward_cross_attention.1} parent=11 // pred_fallthru
          _
        // Predicated region
        $region37: #{backward_cross_attention.1} parent=11 // pred_check
          %p523 = pneg %p233
        $region38: #{backward_cross_attention.1} parent=11 // pred_check_branch
          %525 = sbr.rel (%p523) target = $region40
        $region39: #{backward_cross_attention.1} parent=11 // pred_region
          %s527 = ssub.s32 512, 512
          %528 = vsyncadd [#allocation6], %s527
          %s529 = sshll.u32 [#allocation5], 4
          %s530 = int_to_ptr.vmem [resolvable:$true] %s529
          %535 = dma.hbm_to_vmem [thread:$0]  %s8, 512, %s530, [#allocation6], 128, 128, 8
        $region40: #{backward_cross_attention.1} parent=11 // pred_fallthru
          _
        // Predicated region
        $region41: #{backward_cross_attention.1} parent=11 // pred_check
          %p536 = pneg %p254
        $region42: #{backward_cross_attention.1} parent=11 // pred_check_branch
          %538 = sbr.rel (%p536) target = $region44
        $region43: #{backward_cross_attention.1} parent=11 // pred_region
          _
        $region44: #{backward_cross_attention.1} parent=11 // pred_fallthru
          _
        // Predicated region
        $region45: #{backward_cross_attention.1} parent=11 // pred_check
          %p539 = pneg %p275
        $region46: #{backward_cross_attention.1} parent=11 // pred_check_branch
          %541 = sbr.rel (%p539) target = $region48
        $region47: #{backward_cross_attention.1} parent=11 // pred_region
          %s543 = ssub.s32 512, 512
          %544 = vsyncadd [#allocation6], %s543
          %s545 = sshll.u32 [#allocation7], 4
          %s546 = int_to_ptr.vmem [resolvable:$true] %s545
          %551 = dma.hbm_to_vmem [thread:$0]  %s10, 512, %s546, [#allocation6], 128, 128, 8
        $region48: #{backward_cross_attention.1} parent=11 // pred_fallthru
          _
        // Predicated region
        $region49: #{backward_cross_attention.1} parent=11 // pred_check
          %p552 = pneg %p296
        $region50: #{backward_cross_attention.1} parent=11 // pred_check_branch
          %554 = sbr.rel (%p552) target = $region52
        $region51: #{backward_cross_attention.1} parent=11 // pred_region
          _
        $region52: #{backward_cross_attention.1} parent=11 // pred_fallthru
          _
        // Predicated region
        $region53: #{backward_cross_attention.1} parent=11 // pred_check
          %p555 = pneg %p317
        $region54: #{backward_cross_attention.1} parent=11 // pred_check_branch
          %557 = sbr.rel (%p555) target = $region56
        $region55: #{backward_cross_attention.1} parent=11 // pred_region
          _
        $region56: #{backward_cross_attention.1} parent=11 // pred_fallthru
          _
        // Predicated region
        $region57: #{backward_cross_attention.1} parent=11 // pred_check
          %p558 = pneg %p338
        $region58: #{backward_cross_attention.1} parent=11 // pred_check_branch
          %560 = sbr.rel (%p558) target = $region60
        $region59: #{backward_cross_attention.1} parent=11 // pred_region
          _
        $region60: #{backward_cross_attention.1} parent=11 // pred_fallthru
          _
        // Predicated region
        $region61: #{backward_cross_attention.1} parent=11 // pred_check
          %p561 = pneg %p359
        $region62: #{backward_cross_attention.1} parent=11 // pred_check_branch
          %563 = sbr.rel (%p561) target = $region64
        $region63: #{backward_cross_attention.1} parent=11 // pred_region
          %s565 = ssub.s32 512, 512
          %566 = vsyncadd [#allocation9], %s565
          %s567 = sshll.u32 [#allocation8], 4
          %s568 = int_to_ptr.vmem [resolvable:$true] %s567
          %573 = dma.hbm_to_vmem [thread:$0]  %s14, 512, %s568, [#allocation9], 128, 128, 8
        $region64: #{backward_cross_attention.1} parent=11 // pred_fallthru
          _
        // Predicated region
        $region65: #{backward_cross_attention.1} parent=11 // pred_check
          %p574 = pneg %p380
        $region66: #{backward_cross_attention.1} parent=11 // pred_check_branch
          %576 = sbr.rel (%p574) target = $region68
        $region67: #{backward_cross_attention.1} parent=11 // pred_region
          _
        $region68: #{backward_cross_attention.1} parent=11 // pred_fallthru
          _
        // Predicated region
        $region69: #{backward_cross_attention.1} parent=11 // pred_check
          %p577 = pneg %p401
        $region70: #{backward_cross_attention.1} parent=11 // pred_check_branch
          %579 = sbr.rel (%p577) target = $region72
        $region71: #{backward_cross_attention.1} parent=11 // pred_region
          _
        $region72: #{backward_cross_attention.1} parent=11 // pred_fallthru
          _
        // Predicated region
        $region73: #{backward_cross_attention.1} parent=11 // pred_check
          %p580 = pneg %p422
        $region74: #{backward_cross_attention.1} parent=11 // pred_check_branch
          %582 = sbr.rel (%p580) target = $region76
        $region75: #{backward_cross_attention.1} parent=11 // pred_region
          _
        $region76: #{backward_cross_attention.1} parent=11 // pred_fallthru
          _
        // Predicated region
        $region77: #{backward_cross_attention.1} parent=11 // pred_check
          %p583 = pneg %p443
        $region78: #{backward_cross_attention.1} parent=11 // pred_check_branch
          %585 = sbr.rel (%p583) target = $region80
        $region79: #{backward_cross_attention.1} parent=11 // pred_region
          _
        $region80: #{backward_cross_attention.1} parent=11 // pred_fallthru
          _
        // Predicated region
        $region81: #{backward_cross_attention.1} parent=11 // pred_check
          %p586 = pneg %p464
        $region82: #{backward_cross_attention.1} parent=11 // pred_check_branch
          %588 = sbr.rel (%p586) target = $region84
        $region83: #{backward_cross_attention.1} parent=11 // pred_region
          _
        $region84: #{backward_cross_attention.1} parent=11 // pred_fallthru
          _
      $region12: #{backward_cross_attention.1} parent=5 // pred_fallthru
        _
      %p589 = scmp.lt.s32.totalorder %s34, 2
      // Predicated region
      $region85: #{backward_cross_attention.1} parent=5 // pred_check
        %p590 = pneg %p589
      $region86: #{backward_cross_attention.1} parent=5 // pred_check_branch
        %592 = sbr.rel (%p590) target = $region88
      $region87: #{backward_cross_attention.1} parent=5 // pred_region
        // Predicated region
        $region89: #{backward_cross_attention.1} parent=87 // pred_check
          %p593 = pneg %p54
        $region90: #{backward_cross_attention.1} parent=87 // pred_check_branch
          %595 = sbr.rel (%p593) target = $region92
        $region91: #{backward_cross_attention.1} parent=87 // pred_region
          %s596 = sand.u32 %s44, 1
          %s597 = scalar_lea.sflag [#allocation3], %s596
          %s598 = sand.u32 %s44, 1
          %s599 = smul.addr %s598, 8
          %s600 = scalar_lea.vmem [#allocation2], %s599
          %s602 = ssub.s32 128, 128
          %603 = vsyncadd %s597, %s602
          %s604 = smul.addr %s34, 128
          %s605 = scalar_lea.hbm %s0, %s604
          %s607 = sshll.u32 %s600, 4
          %s608 = int_to_ptr.vmem [resolvable:$true] %s607
          %610 = dma.hbm_to_vmem [thread:$0]  %s605, 128, %s608, %s597
        $region92: #{backward_cross_attention.1} parent=87 // pred_fallthru
          _
        // Predicated region
        $region93: #{backward_cross_attention.1} parent=87 // pred_check
          %p611 = pneg %p80
        $region94: #{backward_cross_attention.1} parent=87 // pred_check_branch
          %613 = sbr.rel (%p611) target = $region96
        $region95: #{backward_cross_attention.1} parent=87 // pred_region
          %p614 = scmp.lt.s32.totalorder %s34, 1
          %s615 = scalar_select %p614, %s34, 1
          %s616 = smul.addr %s615, 2
          %s617 = smul.addr %s616, 8
          %s618 = scalar_lea.vmem %s1, %s617
        $region96: #{backward_cross_attention.1} parent=87 // pred_fallthru
          _
      $region88: #{backward_cross_attention.1} parent=5 // pred_fallthru
        _
      %p619 = scmp.le.s32.totalorder 1, %s34
      %p620 = scmp.lt.s32.totalorder %s34, 3
      %p621 = pnand %p619, %p620
      %p622 = pneg %p621
      // Predicated region
      $region97: #{backward_cross_attention.1} parent=5 // pred_check
        _
      $region98: #{backward_cross_attention.1} parent=5 // pred_check_branch
        %624 = sbr.rel (%p621) target = $region100
      $region99: #{backward_cross_attention.1} parent=5 // pred_region
        %s625 = ssub.s32 %s34, 1
        %s626 = sand.u32 %s47, 1
        %s627 = scalar_lea.sflag [#allocation3], %s626
        %s628 = sand.u32 %s47, 1
        %s629 = smul.addr %s628, 8
        %s630 = scalar_lea.vmem [#allocation2], %s629
        // Predicated region
        $region101: #{backward_cross_attention.1} parent=99 // pred_check
          %p631 = pneg %p60
        $region102: #{backward_cross_attention.1} parent=99 // pred_check_branch
          %633 = sbr.rel (%p631) target = $region104
        $region103: #{backward_cross_attention.1} parent=99 // pred_region
          %634 = dma.done %s627, 128
        $region104: #{backward_cross_attention.1} parent=99 // pred_fallthru
          _
        // Predicated region
        $region105: #{backward_cross_attention.1} parent=99 // pred_check
          %p635 = pneg %p233
        $region106: #{backward_cross_attention.1} parent=99 // pred_check_branch
          %637 = sbr.rel (%p635) target = $region108
        $region107: #{backward_cross_attention.1} parent=99 // pred_region
          %638 = dma.done [#allocation6], 512
        $region108: #{backward_cross_attention.1} parent=99 // pred_fallthru
          _
        // Predicated region
        $region109: #{backward_cross_attention.1} parent=99 // pred_check
          %p639 = pneg %p275
        $region110: #{backward_cross_attention.1} parent=99 // pred_check_branch
          %641 = sbr.rel (%p639) target = $region112
        $region111: #{backward_cross_attention.1} parent=99 // pred_region
          %642 = dma.done [#allocation6], 512
        $region112: #{backward_cross_attention.1} parent=99 // pred_fallthru
          _
        // Predicated region
        $region113: #{backward_cross_attention.1} parent=99 // pred_check
          %p643 = pneg %p359
        $region114: #{backward_cross_attention.1} parent=99 // pred_check_branch
          %645 = sbr.rel (%p643) target = $region116
        $region115: #{backward_cross_attention.1} parent=99 // pred_region
          %646 = dma.done [#allocation9], 512
        $region116: #{backward_cross_attention.1} parent=99 // pred_fallthru
          _
        %s647 = sand.u32 %s47, 1
        %s648 = scalar_lea.sflag [#allocation3], %s647
        %s649 = sand.u32 %s47, 1
        %s650 = smul.addr %s649, 8
        %s651 = scalar_lea.vmem [#allocation2], %s650
        %p652 = pneg %p60
        %p653 = pneg %p57
        %p654 = scmp.lt.s32.totalorder %s39, 1
        %s655 = scalar_select %p654, %s39, 1
        %s656 = smul.addr %s655, 2
        %s657 = smul.addr %s656, 8
        %s658 = scalar_lea.vmem %s1, %s657
        %p659 = pneg %p86
        %p660 = pneg %p83
        %p661 = pneg %p107
        %p662 = pneg %p104
        %p663 = pneg %p128
        %p664 = pneg %p125
        %p665 = pneg %p149
        %p666 = pneg %p146
        %p667 = pneg %p170
        %p668 = pneg %p167
        %p669 = pneg %p191
        %p670 = pneg %p188
        %p671 = pneg %p212
        %p672 = pneg %p209
        %p673 = pneg %p233
        %p674 = pneg %p230
        %p675 = pneg %p254
        %p676 = pneg %p251
        %p677 = pneg %p275
        %p678 = pneg %p272
        %p679 = pneg %p296
        %p680 = pneg %p293
        %p681 = pneg %p317
        %p682 = pneg %p314
        %p683 = pneg %p338
        %p684 = pneg %p335
        %p685 = pneg %p359
        %p686 = pneg %p356
        %p687 = pneg %p380
        %p688 = pneg %p377
        %p689 = pneg %p401
        %p690 = pneg %p398
        %p691 = pneg %p422
        %p692 = pneg %p419
        %p693 = pneg %p443
        %p694 = pneg %p440
        %p695 = pneg %p464
        %p696 = pneg %p461
        %p697 = pneg %p490
        %p698 = pneg %p487
        %s699 = sand.u32 %s477, 1
        %s700 = scalar_lea.sflag [#allocation4], %s699
        %s701 = sand.u32 %s477, 1
        %s702 = smul.addr %s701, 16
        %s703 = scalar_lea.vmem [#allocation10], %s702
        %p704 = scmp.lt.s32.totalorder %s39, 1
        %s705 = scalar_select %p704, %s39, 1
        %s706 = smul.addr %s705, 2
        %s707 = smul.addr %s706, 8
        %s708 = scalar_lea.vmem %s1, %s707
        %v709 = vld [vmem:[%s630] sm:$0xff]
        %v710 = vld [vmem:[%s708] sm:$0xff]
        %v711 = vld [vmem:[%s708 + $0x8] sm:$0xff]
        %v712 = vld [vmem:[%s2] sm:$0x1]
        %v713 = vld [vmem:[%s3] sm:$0x1]
        %vm714 = vcmask 261120
        %v715 = vsel %vm714, %v709, 0.0
        %716 = vadd.xlane.f32.xlu0 %v715
        %v717 = vpop.xlane.xlu0 %716
        %v718 = vrcp.pop 32.0
        %v719 = vmul.f32 %v717, %v718
        %v720 = vsub.f32 %v709, %v719
        %v721 = vmul.f32 %v720, %v720
        %v722 = vsel %vm714, %v721, 0.0
        %723 = vadd.xlane.f32.xlu0 %v722
        %v724 = vpop.xlane.xlu0 %723
        %v725 = vmul.f32 %v724, %v718
        %v726 = vadd.f32 %v725, 1e-05
        %v727 = vrsqrt.pop %v726
        %v728 = vmul.f32 %v720, %v727
        %v730 = vlaneseq
        %v731 = vshrl.u32 %v730, 7
        %v732 = vsub.s32 0, %v731
        %v733 = vrot.slane %v712, %v732
        %v735 = vmul.f32 %v728, %v733
        %v737 = vlaneseq
        %v738 = vshrl.u32 %v737, 7
        %v739 = vsub.s32 0, %v738
        %v740 = vrot.slane %v713, %v739
        %v742 = vadd.f32 %v735, %v740
        %v743 = vld [vmem:[%s4] sm:$0xff]
        %v744 = vld [vmem:[%s4 + $0x8] sm:$0xff]
        %v745 = vld [vmem:[%s4 + $0x10] sm:$0xff]
        %v746 = vld [vmem:[%s4 + $0x18] sm:$0xff]
        %v747 = vld [vmem:[%s5] sm:$0x1]
        %v749 = vlaneseq
        %v750 = vshrl.u32 %v749, 7
        %v751 = vsub.s32 0, %v750
        %v752 = vrot.slane %v747, %v751
        %v755 = vsel %vm714, %v710, 0
        %v758 = vsel %vm714, %v711, 0
        %760 = vmatprep.subr.mxu0 0.0
        %761 = vmatpush1.msra.mxu0 %v743
        %762 = vmatprep.subr.mxu0 0.0
        %763 = vmatpush1.msra.mxu0 %v744
        %764 = vmatprep.subr.mxu0 0.0
        %765 = vmatpush1.msra.mxu0 %v745
        %766 = vmatprep.subr.mxu0 0.0
        %767 = vmatpush1.msra.mxu0 %v746
        %768 = vmatprep.subr.mxu0 0.0
        %769 = vmatpush1.msra.mxu0 0.0
        %770 = vmatprep.subr.mxu0 0.0
        %771 = vmatpush1.msra.mxu0 0.0
        %772 = vmatprep.subr.mxu0 0.0
        %773 = vmatpush1.msra.mxu0 0.0
        %774 = vmatprep.subr.mxu0 0.0
        %775 = vmatpush1.msra.mxu0 0.0
        %776 = vmatprep.subr.mxu0 0.0
        %777 = vmatpush1.msra.mxu0 0.0
        %778 = vmatprep.subr.mxu0 0.0
        %779 = vmatpush1.msra.mxu0 0.0
        %780 = vmatprep.subr.mxu0 0.0
        %781 = vmatpush1.msra.mxu0 0.0
        %782 = vmatprep.subr.mxu0 0.0
        %783 = vmatpush1.msra.mxu0 0.0
        %784 = vmatprep.subr.mxu0 0.0
        %785 = vmatpush1.msra.mxu0 0.0
        %786 = vmatprep.subr.mxu0 0.0
        %787 = vmatpush1.msra.mxu0 0.0
        %788 = vmatprep.subr.mxu0 0.0
        %789 = vmatpush1.msra.mxu0 0.0
        %790 = vmatprep.subr.mxu0 0.0
        %791 = vmatpush1.msra.mxu0 0.0
        %792 = vmatprep.subr.mxu0 0.0
        %793 = vmatpush1.msra.mxu0 0.0
        %794 = vmatprep.subr.mxu0 0.0
        %795 = vmatpush1.msra.mxu0 0.0
        %796 = vmatprep.subr.mxu0 0.0
        %797 = vmatpush1.msra.mxu0 0.0
        %798 = vmatprep.subr.mxu0 0.0
        %799 = vmatpush1.msra.mxu0 0.0
        %800 = vmatprep.subr.mxu0 0.0
        %801 = vmatpush1.msra.mxu0 0.0
        %802 = vmatprep.subr.mxu0 0.0
        %803 = vmatpush1.msra.mxu0 0.0
        %804 = vmatprep.subr.mxu0 0.0
        %805 = vmatpush1.msra.mxu0 0.0
        %806 = vmatprep.subr.mxu0 0.0
        %807 = vmatpush1.msra.mxu0 0.0
        %808 = vmatprep.subr.mxu0 0.0
        %809 = vmatpush1.msra.mxu0 0.0
        %810 = vmatprep.subr.mxu0 0.0
        %811 = vmatpush1.msra.mxu0 0.0
        %812 = vmatprep.subr.mxu0 0.0
        %813 = vmatpush1.msra.mxu0 0.0
        %814 = vmatprep.subr.mxu0 0.0
        %815 = vmatpush1.msra.mxu0 0.0
        %816 = vmatprep.subr.mxu0 0.0
        %817 = vmatpush1.msra.mxu0 0.0
        %818 = vmatprep.subr.mxu0 0.0
        %819 = vmatpush1.msra.mxu0 0.0
        %820 = vmatprep.subr.mxu0 0.0
        %821 = vmatpush1.msra.mxu0 0.0
        %822 = vmatprep.subr.mxu0 0.0
        %823 = vmatpush1.msra.mxu0 0.0
        %824 = vmatprep.mubr.f32.mxu0 0.0
        %825 = vmatmul.mubr.f32.gmra.mrb[0].mxu0 %v755
        %v826 = vpop.f32.mrb[0].mxu0
        %v827 = vadd.f32 %v752, %v826
        %v828 = vpop.f32.mrb[0].mxu0
        %829 = vmatprep.mubr.f32.mxu0 0.0
        %830 = vmatmul.mubr.f32.gmra.mrb[0].mxu0 %v758
        %v831 = vpop.f32.mrb[0].mxu0
        %v832 = vadd.f32 %v752, %v831
        %v833 = vpop.f32.mrb[0].mxu0
        %834 = vdwg.mxu0
        %v835 = vld [vmem:[%s6] sm:$0xff]
        %v836 = vld [vmem:[%s6 + $0x8] sm:$0xff]
        %v837 = vld [vmem:[%s6 + $0x10] sm:$0xff]
        %v838 = vld [vmem:[%s6 + $0x18] sm:$0xff]
        %v839 = vld [vmem:[%s7] sm:$0x1]
        %v841 = vlaneseq
        %v842 = vshrl.u32 %v841, 7
        %v843 = vsub.s32 0, %v842
        %v844 = vrot.slane %v839, %v843
        %v847 = vsel %vm714, %v742, 0
        %849 = vmatprep.subr.mxu0 0.0
        %850 = vmatpush1.msra.mxu0 %v835
        %851 = vmatprep.subr.mxu0 0.0
        %852 = vmatpush1.msra.mxu0 %v836
        %853 = vmatprep.subr.mxu0 0.0
        %854 = vmatpush1.msra.mxu0 %v837
        %855 = vmatprep.subr.mxu0 0.0
        %856 = vmatpush1.msra.mxu0 %v838
        %857 = vmatprep.subr.mxu0 0.0
        %858 = vmatpush1.msra.mxu0 0.0
        %859 = vmatprep.subr.mxu0 0.0
        %860 = vmatpush1.msra.mxu0 0.0
        %861 = vmatprep.subr.mxu0 0.0
        %862 = vmatpush1.msra.mxu0 0.0
        %863 = vmatprep.subr.mxu0 0.0
        %864 = vmatpush1.msra.mxu0 0.0
        %865 = vmatprep.subr.mxu0 0.0
        %866 = vmatpush1.msra.mxu0 0.0
        %867 = vmatprep.subr.mxu0 0.0
        %868 = vmatpush1.msra.mxu0 0.0
        %869 = vmatprep.subr.mxu0 0.0
        %870 = vmatpush1.msra.mxu0 0.0
        %871 = vmatprep.subr.mxu0 0.0
        %872 = vmatpush1.msra.mxu0 0.0
        %873 = vmatprep.subr.mxu0 0.0
        %874 = vmatpush1.msra.mxu0 0.0
        %875 = vmatprep.subr.mxu0 0.0
        %876 = vmatpush1.msra.mxu0 0.0
        %877 = vmatprep.subr.mxu0 0.0
        %878 = vmatpush1.msra.mxu0 0.0
        %879 = vmatprep.subr.mxu0 0.0
        %880 = vmatpush1.msra.mxu0 0.0
        %881 = vmatprep.subr.mxu0 0.0
        %882 = vmatpush1.msra.mxu0 0.0
        %883 = vmatprep.subr.mxu0 0.0
        %884 = vmatpush1.msra.mxu0 0.0
        %885 = vmatprep.subr.mxu0 0.0
        %886 = vmatpush1.msra.mxu0 0.0
        %887 = vmatprep.subr.mxu0 0.0
        %888 = vmatpush1.msra.mxu0 0.0
        %889 = vmatprep.subr.mxu0 0.0
        %890 = vmatpush1.msra.mxu0 0.0
        %891 = vmatprep.subr.mxu0 0.0
        %892 = vmatpush1.msra.mxu0 0.0
        %893 = vmatprep.subr.mxu0 0.0
        %894 = vmatpush1.msra.mxu0 0.0
        %895 = vmatprep.subr.mxu0 0.0
        %896 = vmatpush1.msra.mxu0 0.0
        %897 = vmatprep.subr.mxu0 0.0
        %898 = vmatpush1.msra.mxu0 0.0
        %899 = vmatprep.subr.mxu0 0.0
        %900 = vmatpush1.msra.mxu0 0.0
        %901 = vmatprep.subr.mxu0 0.0
        %902 = vmatpush1.msra.mxu0 0.0
        %903 = vmatprep.subr.mxu0 0.0
        %904 = vmatpush1.msra.mxu0 0.0
        %905 = vmatprep.subr.mxu0 0.0
        %906 = vmatpush1.msra.mxu0 0.0
        %907 = vmatprep.subr.mxu0 0.0
        %908 = vmatpush1.msra.mxu0 0.0
        %909 = vmatprep.subr.mxu0 0.0
        %910 = vmatpush1.msra.mxu0 0.0
        %911 = vmatprep.subr.mxu0 0.0
        %912 = vmatpush1.msra.mxu0 0.0
        %913 = vmatprep.mubr.f32.mxu0 0.0
        %914 = vmatmul.mubr.f32.gmra.mrb[0].mxu0 %v847
        %v915 = vpop.f32.mrb[0].mxu0
        %v916 = vadd.f32 %v844, %v915
        %v917 = vpop.f32.mrb[0].mxu0
        %918 = vdwg.mxu0
        %v919 = vld [vmem:[#allocation5] sm:$0xff]
        %v920 = vld [vmem:[#allocation5 + $0x8] sm:$0xff]
        %v921 = vld [vmem:[#allocation5 + $0x10] sm:$0xff]
        %v922 = vld [vmem:[#allocation5 + $0x18] sm:$0xff]
        %v923 = vld [vmem:[%s9] sm:$0x1]
        %v925 = vlaneseq
        %v926 = vshrl.u32 %v925, 7
        %v927 = vsub.s32 0, %v926
        %v928 = vrot.slane %v923, %v927
        %930 = vmatprep.subr.mxu0 0.0
        %931 = vmatpush1.msra.mxu0 %v919
        %932 = vmatprep.subr.mxu0 0.0
        %933 = vmatpush1.msra.mxu0 %v920
        %934 = vmatprep.subr.mxu0 0.0
        %935 = vmatpush1.msra.mxu0 %v921
        %936 = vmatprep.subr.mxu0 0.0
        %937 = vmatpush1.msra.mxu0 %v922
        %938 = vmatprep.subr.mxu0 0.0
        %939 = vmatpush1.msra.mxu0 0.0
        %940 = vmatprep.subr.mxu0 0.0
        %941 = vmatpush1.msra.mxu0 0.0
        %942 = vmatprep.subr.mxu0 0.0
        %943 = vmatpush1.msra.mxu0 0.0
        %944 = vmatprep.subr.mxu0 0.0
        %945 = vmatpush1.msra.mxu0 0.0
        %946 = vmatprep.subr.mxu0 0.0
        %947 = vmatpush1.msra.mxu0 0.0
        %948 = vmatprep.subr.mxu0 0.0
        %949 = vmatpush1.msra.mxu0 0.0
        %950 = vmatprep.subr.mxu0 0.0
        %951 = vmatpush1.msra.mxu0 0.0
        %952 = vmatprep.subr.mxu0 0.0
        %953 = vmatpush1.msra.mxu0 0.0
        %954 = vmatprep.subr.mxu0 0.0
        %955 = vmatpush1.msra.mxu0 0.0
        %956 = vmatprep.subr.mxu0 0.0
        %957 = vmatpush1.msra.mxu0 0.0
        %958 = vmatprep.subr.mxu0 0.0
        %959 = vmatpush1.msra.mxu0 0.0
        %960 = vmatprep.subr.mxu0 0.0
        %961 = vmatpush1.msra.mxu0 0.0
        %962 = vmatprep.subr.mxu0 0.0
        %963 = vmatpush1.msra.mxu0 0.0
        %964 = vmatprep.subr.mxu0 0.0
        %965 = vmatpush1.msra.mxu0 0.0
        %966 = vmatprep.subr.mxu0 0.0
        %967 = vmatpush1.msra.mxu0 0.0
        %968 = vmatprep.subr.mxu0 0.0
        %969 = vmatpush1.msra.mxu0 0.0
        %970 = vmatprep.subr.mxu0 0.0
        %971 = vmatpush1.msra.mxu0 0.0
        %972 = vmatprep.subr.mxu0 0.0
        %973 = vmatpush1.msra.mxu0 0.0
        %974 = vmatprep.subr.mxu0 0.0
        %975 = vmatpush1.msra.mxu0 0.0
        %976 = vmatprep.subr.mxu0 0.0
        %977 = vmatpush1.msra.mxu0 0.0
        %978 = vmatprep.subr.mxu0 0.0
        %979 = vmatpush1.msra.mxu0 0.0
        %980 = vmatprep.subr.mxu0 0.0
        %981 = vmatpush1.msra.mxu0 0.0
        %982 = vmatprep.subr.mxu0 0.0
        %983 = vmatpush1.msra.mxu0 0.0
        %984 = vmatprep.subr.mxu0 0.0
        %985 = vmatpush1.msra.mxu0 0.0
        %986 = vmatprep.subr.mxu0 0.0
        %987 = vmatpush1.msra.mxu0 0.0
        %988 = vmatprep.subr.mxu0 0.0
        %989 = vmatpush1.msra.mxu0 0.0
        %990 = vmatprep.subr.mxu0 0.0
        %991 = vmatpush1.msra.mxu0 0.0
        %992 = vmatprep.subr.mxu0 0.0
        %993 = vmatpush1.msra.mxu0 0.0
        %994 = vmatprep.mubr.f32.mxu0 0.0
        %995 = vmatmul.mubr.f32.gmra.mrb[0].mxu0 %v847
        %v996 = vpop.f32.mrb[0].mxu0
        %v997 = vadd.f32 %v928, %v996
        %v998 = vpop.f32.mrb[0].mxu0
        %999 = vdwg.mxu0
        %vm1000 = vcmask 64512
        %v1002 = vsel %vm1000, %v827, 0
        %v1005 = vsel %vm1000, %v832, 0
        %v1008 = vsel %vm1000, %v916, 0
        %1010 = vmatprep.subr.mxu0 0.0
        %1011 = vmatpush1.xpose.msra.mxu0 %v1008
        %1012 = vmatprep.subr.mxu0 0.0
        %1013 = vmatpush1.xpose.msra.mxu0 0.0
        %1014 = vmatprep.subr.mxu0 0.0
        %1015 = vmatpush1.xpose.msra.mxu0 0.0
        %1016 = vmatprep.subr.mxu0 0.0
        %1017 = vmatpush1.xpose.msra.mxu0 0.0
        %1018 = vmatprep.subr.mxu0 0.0
        %1019 = vmatpush1.xpose.msra.mxu0 0.0
        %1020 = vmatprep.subr.mxu0 0.0
        %1021 = vmatpush1.xpose.msra.mxu0 0.0
        %1022 = vmatprep.subr.mxu0 0.0
        %1023 = vmatpush1.xpose.msra.mxu0 0.0
        %1024 = vmatprep.subr.mxu0 0.0
        %1025 = vmatpush1.xpose.msra.mxu0 0.0
        %1026 = vmatprep.subr.mxu0 0.0
        %1027 = vmatpush1.xpose.msra.mxu0 0.0
        %1028 = vmatprep.subr.mxu0 0.0
        %1029 = vmatpush1.xpose.msra.mxu0 0.0
        %1030 = vmatprep.subr.mxu0 0.0
        %1031 = vmatpush1.xpose.msra.mxu0 0.0
        %1032 = vmatprep.subr.mxu0 0.0
        %1033 = vmatpush1.xpose.msra.mxu0 0.0
        %1034 = vmatprep.subr.mxu0 0.0
        %1035 = vmatpush1.xpose.msra.mxu0 0.0
        %1036 = vmatprep.subr.mxu0 0.0
        %1037 = vmatpush1.xpose.msra.mxu0 0.0
        %1038 = vmatprep.subr.mxu0 0.0
        %1039 = vmatpush1.xpose.msra.mxu0 0.0
        %1040 = vmatprep.subr.mxu0 0.0
        %1041 = vmatpush1.xpose.msra.mxu0 0.0
        %1042 = vmatprep.subr.mxu0 0.0
        %1043 = vmatpush1.xpose.msra.mxu0 0.0
        %1044 = vmatprep.subr.mxu0 0.0
        %1045 = vmatpush1.xpose.msra.mxu0 0.0
        %1046 = vmatprep.subr.mxu0 0.0
        %1047 = vmatpush1.xpose.msra.mxu0 0.0
        %1048 = vmatprep.subr.mxu0 0.0
        %1049 = vmatpush1.xpose.msra.mxu0 0.0
        %1050 = vmatprep.subr.mxu0 0.0
        %1051 = vmatpush1.xpose.msra.mxu0 0.0
        %1052 = vmatprep.subr.mxu0 0.0
        %1053 = vmatpush1.xpose.msra.mxu0 0.0
        %1054 = vmatprep.subr.mxu0 0.0
        %1055 = vmatpush1.xpose.msra.mxu0 0.0
        %1056 = vmatprep.subr.mxu0 0.0
        %1057 = vmatpush1.xpose.msra.mxu0 0.0
        %1058 = vmatprep.subr.mxu0 0.0
        %1059 = vmatpush1.xpose.msra.mxu0 0.0
        %1060 = vmatprep.subr.mxu0 0.0
        %1061 = vmatpush1.xpose.msra.mxu0 0.0
        %1062 = vmatprep.subr.mxu0 0.0
        %1063 = vmatpush1.xpose.msra.mxu0 0.0
        %1064 = vmatprep.subr.mxu0 0.0
        %1065 = vmatpush1.xpose.msra.mxu0 0.0
        %1066 = vmatprep.subr.mxu0 0.0
        %1067 = vmatpush1.xpose.msra.mxu0 0.0
        %1068 = vmatprep.subr.mxu0 0.0
        %1069 = vmatpush1.xpose.msra.mxu0 0.0
        %1070 = vmatprep.subr.mxu0 0.0
        %1071 = vmatpush1.xpose.msra.mxu0 0.0
        %1072 = vmatprep.subr.mxu0 0.0
        %1073 = vmatpush1.xpose.msra.mxu0 0.0
        %1074 = vmatprep.mubr.f32.mxu0 0.0
        %1075 = vmatmul.mubr.f32.gmra.mrb[0].mxu0 %v1002
        %v1076 = vpop.f32.mrb[0].mxu0
        %v1077 = vadd.f32 0.0, %v1076
        %v1078 = vpop.f32.mrb[0].mxu0
        %1079 = vmatprep.mubr.f32.mxu0 0.0
        %1080 = vmatmul.mubr.f32.gmra.mrb[0].mxu0 %v1005
        %v1081 = vpop.f32.mrb[0].mxu0
        %v1082 = vadd.f32 0.0, %v1081
        %v1083 = vpop.f32.mrb[0].mxu0
        %1084 = vdwg.mxu0
        %v1085 = vmul.f32 %v1077, 0.35355338
        %v1086 = vmul.f32 %v1082, 0.35355338
        %v1087 = vsel %vm1000, %v1085, -inf
        %1088 = vmax.xlane.f32.xlu0 %v1087
        %v1089 = vpop.xlane.xlu0 %1088
        %v1090 = vsel %vm1000, %v1086, -inf
        %1091 = vmax.xlane.f32.xlu0 %v1090
        %v1092 = vpop.xlane.xlu0 %1091
        %v1093 = vsub.f32 %v1085, %v1089
        %v1094 = vsub.f32 %v1086, %v1092
        %v1095 = vmul.f32 %v1093, 1.442695
        %v1096 = vpow.pop %v1095
        %v1097 = vmul.f32 %v1094, 1.442695
        %v1098 = vpow.pop %v1097
        %v1099 = vsel %vm1000, %v1096, 0.0
        %1100 = vadd.xlane.f32.xlu0 %v1099
        %v1101 = vpop.xlane.xlu0 %1100
        %v1102 = vsel %vm1000, %v1098, 0.0
        %1103 = vadd.xlane.f32.xlu0 %v1102
        %v1104 = vpop.xlane.xlu0 %1103
        %v1105 = vrcp.pop %v1101
        %v1106 = vmul.f32 %v1096, %v1105
        %v1107 = vrcp.pop %v1104
        %v1108 = vmul.f32 %v1098, %v1107
        %v1110 = vsel %vm1000, %v1106, 0
        %v1113 = vsel %vm1000, %v1108, 0
        %1115 = vmatprep.subr.mxu0 0.0
        %1116 = vmatpush1.msra.mxu0 %v997
        %1117 = vmatprep.subr.mxu0 0.0
        %1118 = vmatpush1.msra.mxu0 0.0
        %1119 = vmatprep.subr.mxu0 0.0
        %1120 = vmatpush1.msra.mxu0 0.0
        %1121 = vmatprep.subr.mxu0 0.0
        %1122 = vmatpush1.msra.mxu0 0.0
        %1123 = vmatprep.subr.mxu0 0.0
        %1124 = vmatpush1.msra.mxu0 0.0
        %1125 = vmatprep.subr.mxu0 0.0
        %1126 = vmatpush1.msra.mxu0 0.0
        %1127 = vmatprep.subr.mxu0 0.0
        %1128 = vmatpush1.msra.mxu0 0.0
        %1129 = vmatprep.subr.mxu0 0.0
        %1130 = vmatpush1.msra.mxu0 0.0
        %1131 = vmatprep.subr.mxu0 0.0
        %1132 = vmatpush1.msra.mxu0 0.0
        %1133 = vmatprep.subr.mxu0 0.0
        %1134 = vmatpush1.msra.mxu0 0.0
        %1135 = vmatprep.subr.mxu0 0.0
        %1136 = vmatpush1.msra.mxu0 0.0
        %1137 = vmatprep.subr.mxu0 0.0
        %1138 = vmatpush1.msra.mxu0 0.0
        %1139 = vmatprep.subr.mxu0 0.0
        %1140 = vmatpush1.msra.mxu0 0.0
        %1141 = vmatprep.subr.mxu0 0.0
        %1142 = vmatpush1.msra.mxu0 0.0
        %1143 = vmatprep.subr.mxu0 0.0
        %1144 = vmatpush1.msra.mxu0 0.0
        %1145 = vmatprep.subr.mxu0 0.0
        %1146 = vmatpush1.msra.mxu0 0.0
        %1147 = vmatprep.subr.mxu0 0.0
        %1148 = vmatpush1.msra.mxu0 0.0
        %1149 = vmatprep.subr.mxu0 0.0
        %1150 = vmatpush1.msra.mxu0 0.0
        %1151 = vmatprep.subr.mxu0 0.0
        %1152 = vmatpush1.msra.mxu0 0.0
        %1153 = vmatprep.subr.mxu0 0.0
        %1154 = vmatpush1.msra.mxu0 0.0
        %1155 = vmatprep.subr.mxu0 0.0
        %1156 = vmatpush1.msra.mxu0 0.0
        %1157 = vmatprep.subr.mxu0 0.0
        %1158 = vmatpush1.msra.mxu0 0.0
        %1159 = vmatprep.subr.mxu0 0.0
        %1160 = vmatpush1.msra.mxu0 0.0
        %1161 = vmatprep.subr.mxu0 0.0
        %1162 = vmatpush1.msra.mxu0 0.0
        %1163 = vmatprep.subr.mxu0 0.0
        %1164 = vmatpush1.msra.mxu0 0.0
        %1165 = vmatprep.subr.mxu0 0.0
        %1166 = vmatpush1.msra.mxu0 0.0
        %1167 = vmatprep.subr.mxu0 0.0
        %1168 = vmatpush1.msra.mxu0 0.0
        %1169 = vmatprep.subr.mxu0 0.0
        %1170 = vmatpush1.msra.mxu0 0.0
        %1171 = vmatprep.subr.mxu0 0.0
        %1172 = vmatpush1.msra.mxu0 0.0
        %1173 = vmatprep.subr.mxu0 0.0
        %1174 = vmatpush1.msra.mxu0 0.0
        %1175 = vmatprep.subr.mxu0 0.0
        %1176 = vmatpush1.msra.mxu0 0.0
        %1177 = vmatprep.subr.mxu0 0.0
        %1178 = vmatpush1.msra.mxu0 0.0
        %1179 = vmatprep.mubr.f32.mxu0 0.0
        %1180 = vmatmul.mubr.f32.gmra.mrb[0].mxu0 %v1110
        %v1181 = vpop.f32.mrb[0].mxu0
        %v1182 = vadd.f32 0.0, %v1181
        %v1183 = vpop.f32.mrb[0].mxu0
        %1184 = vmatprep.mubr.f32.mxu0 0.0
        %1185 = vmatmul.mubr.f32.gmra.mrb[0].mxu0 %v1113
        %v1186 = vpop.f32.mrb[0].mxu0
        %v1187 = vadd.f32 0.0, %v1186
        %v1188 = vpop.f32.mrb[0].mxu0
        %1189 = vdwg.mxu0
        %v1190 = vld [vmem:[#allocation7] sm:$0xff]
        %1191 = vrot.lane.b32.xlu0 %v827, 120
        %v1192 = vpop.permute.xlu0 %1191
        %1193 = vrot.lane.b32.xlu0 %v832, 120
        %v1194 = vpop.permute.xlu0 %1193
        %1195 = vrot.lane.b32.xlu0 %v916, 120
        %v1196 = vpop.permute.xlu0 %1195
        %v1197 = vsel %vm1000, %v1192, 0
        %v1199 = vsel %vm1000, %v1194, 0
        %v1201 = vsel %vm1000, %v1196, 0
        %1203 = vmatprep.subr.mxu0 0.0
        %1204 = vmatpush1.xpose.msra.mxu0 %v1201
        %1205 = vmatprep.subr.mxu0 0.0
        %1206 = vmatpush1.xpose.msra.mxu0 0.0
        %1207 = vmatprep.subr.mxu0 0.0
        %1208 = vmatpush1.xpose.msra.mxu0 0.0
        %1209 = vmatprep.subr.mxu0 0.0
        %1210 = vmatpush1.xpose.msra.mxu0 0.0
        %1211 = vmatprep.subr.mxu0 0.0
        %1212 = vmatpush1.xpose.msra.mxu0 0.0
        %1213 = vmatprep.subr.mxu0 0.0
        %1214 = vmatpush1.xpose.msra.mxu0 0.0
        %1215 = vmatprep.subr.mxu0 0.0
        %1216 = vmatpush1.xpose.msra.mxu0 0.0
        %1217 = vmatprep.subr.mxu0 0.0
        %1218 = vmatpush1.xpose.msra.mxu0 0.0
        %1219 = vmatprep.subr.mxu0 0.0
        %1220 = vmatpush1.xpose.msra.mxu0 0.0
        %1221 = vmatprep.subr.mxu0 0.0
        %1222 = vmatpush1.xpose.msra.mxu0 0.0
        %1223 = vmatprep.subr.mxu0 0.0
        %1224 = vmatpush1.xpose.msra.mxu0 0.0
        %1225 = vmatprep.subr.mxu0 0.0
        %1226 = vmatpush1.xpose.msra.mxu0 0.0
        %1227 = vmatprep.subr.mxu0 0.0
        %1228 = vmatpush1.xpose.msra.mxu0 0.0
        %1229 = vmatprep.subr.mxu0 0.0
        %1230 = vmatpush1.xpose.msra.mxu0 0.0
        %1231 = vmatprep.subr.mxu0 0.0
        %1232 = vmatpush1.xpose.msra.mxu0 0.0
        %1233 = vmatprep.subr.mxu0 0.0
        %1234 = vmatpush1.xpose.msra.mxu0 0.0
        %1235 = vmatprep.subr.mxu0 0.0
        %1236 = vmatpush1.xpose.msra.mxu0 0.0
        %1237 = vmatprep.subr.mxu0 0.0
        %1238 = vmatpush1.xpose.msra.mxu0 0.0
        %1239 = vmatprep.subr.mxu0 0.0
        %1240 = vmatpush1.xpose.msra.mxu0 0.0
        %1241 = vmatprep.subr.mxu0 0.0
        %1242 = vmatpush1.xpose.msra.mxu0 0.0
        %1243 = vmatprep.subr.mxu0 0.0
        %1244 = vmatpush1.xpose.msra.mxu0 0.0
        %1245 = vmatprep.subr.mxu0 0.0
        %1246 = vmatpush1.xpose.msra.mxu0 0.0
        %1247 = vmatprep.subr.mxu0 0.0
        %1248 = vmatpush1.xpose.msra.mxu0 0.0
        %1249 = vmatprep.subr.mxu0 0.0
        %1250 = vmatpush1.xpose.msra.mxu0 0.0
        %1251 = vmatprep.subr.mxu0 0.0
        %1252 = vmatpush1.xpose.msra.mxu0 0.0
        %1253 = vmatprep.subr.mxu0 0.0
        %1254 = vmatpush1.xpose.msra.mxu0 0.0
        %1255 = vmatprep.subr.mxu0 0.0
        %1256 = vmatpush1.xpose.msra.mxu0 0.0
        %1257 = vmatprep.subr.mxu0 0.0
        %1258 = vmatpush1.xpose.msra.mxu0 0.0
        %1259 = vmatprep.subr.mxu0 0.0
        %1260 = vmatpush1.xpose.msra.mxu0 0.0
        %1261 = vmatprep.subr.mxu0 0.0
        %1262 = vmatpush1.xpose.msra.mxu0 0.0
        %1263 = vmatprep.subr.mxu0 0.0
        %1264 = vmatpush1.xpose.msra.mxu0 0.0
        %1265 = vmatprep.subr.mxu0 0.0
        %1266 = vmatpush1.xpose.msra.mxu0 0.0
        %1267 = vmatprep.mubr.f32.mxu0 0.0
        %1268 = vmatmul.mubr.f32.gmra.mrb[0].mxu0 %v1197
        %v1269 = vpop.f32.mrb[0].mxu0
        %v1270 = vadd.f32 0.0, %v1269
        %v1271 = vpop.f32.mrb[0].mxu0
        %1272 = vmatprep.mubr.f32.mxu0 0.0
        %1273 = vmatmul.mubr.f32.gmra.mrb[0].mxu0 %v1199
        %v1274 = vpop.f32.mrb[0].mxu0
        %v1275 = vadd.f32 0.0, %v1274
        %v1276 = vpop.f32.mrb[0].mxu0
        %1277 = vdwg.mxu0
        %v1278 = vmul.f32 %v1270, 0.35355338
        %v1279 = vmul.f32 %v1275, 0.35355338
        %v1280 = vsel %vm1000, %v1278, -inf
        %1281 = vmax.xlane.f32.xlu0 %v1280
        %v1282 = vpop.xlane.xlu0 %1281
        %v1283 = vsel %vm1000, %v1279, -inf
        %1284 = vmax.xlane.f32.xlu0 %v1283
        %v1285 = vpop.xlane.xlu0 %1284
        %v1286 = vsub.f32 %v1278, %v1282
        %v1287 = vsub.f32 %v1279, %v1285
        %v1288 = vmul.f32 %v1286, 1.442695
        %v1289 = vpow.pop %v1288
        %v1290 = vmul.f32 %v1287, 1.442695
        %v1291 = vpow.pop %v1290
        %v1292 = vsel %vm1000, %v1289, 0.0
        %1293 = vadd.xlane.f32.xlu0 %v1292
        %v1294 = vpop.xlane.xlu0 %1293
        %v1295 = vsel %vm1000, %v1291, 0.0
        %1296 = vadd.xlane.f32.xlu0 %v1295
        %v1297 = vpop.xlane.xlu0 %1296
        %v1298 = vrcp.pop %v1294
        %v1299 = vmul.f32 %v1289, %v1298
        %v1300 = vrcp.pop %v1297
        %v1301 = vmul.f32 %v1291, %v1300
        %1303 = vrot.lane.b32.xlu0 %v997, 120
        %v1304 = vpop.permute.xlu0 %1303
        %v1307 = vsel %vm1000, %v1299, 0
        %v1310 = vsel %vm1000, %v1301, 0
        %1312 = vmatprep.subr.mxu0 0.0
        %1313 = vmatpush1.msra.mxu0 %v1304
        %1314 = vmatprep.subr.mxu0 0.0
        %1315 = vmatpush1.msra.mxu0 0.0
        %1316 = vmatprep.subr.mxu0 0.0
        %1317 = vmatpush1.msra.mxu0 0.0
        %1318 = vmatprep.subr.mxu0 0.0
        %1319 = vmatpush1.msra.mxu0 0.0
        %1320 = vmatprep.subr.mxu0 0.0
        %1321 = vmatpush1.msra.mxu0 0.0
        %1322 = vmatprep.subr.mxu0 0.0
        %1323 = vmatpush1.msra.mxu0 0.0
        %1324 = vmatprep.subr.mxu0 0.0
        %1325 = vmatpush1.msra.mxu0 0.0
        %1326 = vmatprep.subr.mxu0 0.0
        %1327 = vmatpush1.msra.mxu0 0.0
        %1328 = vmatprep.subr.mxu0 0.0
        %1329 = vmatpush1.msra.mxu0 0.0
        %1330 = vmatprep.subr.mxu0 0.0
        %1331 = vmatpush1.msra.mxu0 0.0
        %1332 = vmatprep.subr.mxu0 0.0
        %1333 = vmatpush1.msra.mxu0 0.0
        %1334 = vmatprep.subr.mxu0 0.0
        %1335 = vmatpush1.msra.mxu0 0.0
        %1336 = vmatprep.subr.mxu0 0.0
        %1337 = vmatpush1.msra.mxu0 0.0
        %1338 = vmatprep.subr.mxu0 0.0
        %1339 = vmatpush1.msra.mxu0 0.0
        %1340 = vmatprep.subr.mxu0 0.0
        %1341 = vmatpush1.msra.mxu0 0.0
        %1342 = vmatprep.subr.mxu0 0.0
        %1343 = vmatpush1.msra.mxu0 0.0
        %1344 = vmatprep.subr.mxu0 0.0
        %1345 = vmatpush1.msra.mxu0 0.0
        %1346 = vmatprep.subr.mxu0 0.0
        %1347 = vmatpush1.msra.mxu0 0.0
        %1348 = vmatprep.subr.mxu0 0.0
        %1349 = vmatpush1.msra.mxu0 0.0
        %1350 = vmatprep.subr.mxu0 0.0
        %1351 = vmatpush1.msra.mxu0 0.0
        %1352 = vmatprep.subr.mxu0 0.0
        %1353 = vmatpush1.msra.mxu0 0.0
        %1354 = vmatprep.subr.mxu0 0.0
        %1355 = vmatpush1.msra.mxu0 0.0
        %1356 = vmatprep.subr.mxu0 0.0
        %1357 = vmatpush1.msra.mxu0 0.0
        %1358 = vmatprep.subr.mxu0 0.0
        %1359 = vmatpush1.msra.mxu0 0.0
        %1360 = vmatprep.subr.mxu0 0.0
        %1361 = vmatpush1.msra.mxu0 0.0
        %1362 = vmatprep.subr.mxu0 0.0
        %1363 = vmatpush1.msra.mxu0 0.0
        %1364 = vmatprep.subr.mxu0 0.0
        %1365 = vmatpush1.msra.mxu0 0.0
        %1366 = vmatprep.subr.mxu0 0.0
        %1367 = vmatpush1.msra.mxu0 0.0
        %1368 = vmatprep.subr.mxu0 0.0
        %1369 = vmatpush1.msra.mxu0 0.0
        %1370 = vmatprep.subr.mxu0 0.0
        %1371 = vmatpush1.msra.mxu0 0.0
        %1372 = vmatprep.subr.mxu0 0.0
        %1373 = vmatpush1.msra.mxu0 0.0
        %1374 = vmatprep.subr.mxu0 0.0
        %1375 = vmatpush1.msra.mxu0 0.0
        %1376 = vmatprep.mubr.f32.mxu0 0.0
        %1377 = vmatmul.mubr.f32.gmra.mrb[0].mxu0 %v1307
        %v1378 = vpop.f32.mrb[0].mxu0
        %v1379 = vadd.f32 0.0, %v1378
        %v1380 = vpop.f32.mrb[0].mxu0
        %1381 = vmatprep.mubr.f32.mxu0 0.0
        %1382 = vmatmul.mubr.f32.gmra.mrb[0].mxu0 %v1310
        %v1383 = vpop.f32.mrb[0].mxu0
        %v1384 = vadd.f32 0.0, %v1383
        %v1385 = vpop.f32.mrb[0].mxu0
        %1386 = vdwg.mxu0
        %v1387 = vld [vmem:[#allocation7 + $0x8] sm:$0xff]
        %v1389 = vsel %vm1000, %v1379, 0
        %v1392 = vsel %vm1000, %v1384, 0
        %1394 = vmatprep.subr.mxu0 0.0
        %1395 = vmatpush1.msra.mxu0 %v1387
        %1396 = vmatprep.subr.mxu0 0.0
        %1397 = vmatpush1.msra.mxu0 0.0
        %1398 = vmatprep.subr.mxu0 0.0
        %1399 = vmatpush1.msra.mxu0 0.0
        %1400 = vmatprep.subr.mxu0 0.0
        %1401 = vmatpush1.msra.mxu0 0.0
        %1402 = vmatprep.subr.mxu0 0.0
        %1403 = vmatpush1.msra.mxu0 0.0
        %1404 = vmatprep.subr.mxu0 0.0
        %1405 = vmatpush1.msra.mxu0 0.0
        %1406 = vmatprep.subr.mxu0 0.0
        %1407 = vmatpush1.msra.mxu0 0.0
        %1408 = vmatprep.subr.mxu0 0.0
        %1409 = vmatpush1.msra.mxu0 0.0
        %1410 = vmatprep.subr.mxu0 0.0
        %1411 = vmatpush1.msra.mxu0 0.0
        %1412 = vmatprep.subr.mxu0 0.0
        %1413 = vmatpush1.msra.mxu0 0.0
        %1414 = vmatprep.subr.mxu0 0.0
        %1415 = vmatpush1.msra.mxu0 0.0
        %1416 = vmatprep.subr.mxu0 0.0
        %1417 = vmatpush1.msra.mxu0 0.0
        %1418 = vmatprep.subr.mxu0 0.0
        %1419 = vmatpush1.msra.mxu0 0.0
        %1420 = vmatprep.subr.mxu0 0.0
        %1421 = vmatpush1.msra.mxu0 0.0
        %1422 = vmatprep.subr.mxu0 0.0
        %1423 = vmatpush1.msra.mxu0 0.0
        %1424 = vmatprep.subr.mxu0 0.0
        %1425 = vmatpush1.msra.mxu0 0.0
        %1426 = vmatprep.subr.mxu0 0.0
        %1427 = vmatpush1.msra.mxu0 0.0
        %1428 = vmatprep.subr.mxu0 0.0
        %1429 = vmatpush1.msra.mxu0 0.0
        %1430 = vmatprep.subr.mxu0 0.0
        %1431 = vmatpush1.msra.mxu0 0.0
        %1432 = vmatprep.subr.mxu0 0.0
        %1433 = vmatpush1.msra.mxu0 0.0
        %1434 = vmatprep.subr.mxu0 0.0
        %1435 = vmatpush1.msra.mxu0 0.0
        %1436 = vmatprep.subr.mxu0 0.0
        %1437 = vmatpush1.msra.mxu0 0.0
        %1438 = vmatprep.subr.mxu0 0.0
        %1439 = vmatpush1.msra.mxu0 0.0
        %1440 = vmatprep.subr.mxu0 0.0
        %1441 = vmatpush1.msra.mxu0 0.0
        %1442 = vmatprep.subr.mxu0 0.0
        %1443 = vmatpush1.msra.mxu0 0.0
        %1444 = vmatprep.subr.mxu0 0.0
        %1445 = vmatpush1.msra.mxu0 0.0
        %1446 = vmatprep.subr.mxu0 0.0
        %1447 = vmatpush1.msra.mxu0 0.0
        %1448 = vmatprep.subr.mxu0 0.0
        %1449 = vmatpush1.msra.mxu0 0.0
        %1450 = vmatprep.subr.mxu0 0.0
        %1451 = vmatpush1.msra.mxu0 0.0
        %1452 = vmatprep.subr.mxu0 0.0
        %1453 = vmatpush1.msra.mxu0 0.0
        %1454 = vmatprep.subr.mxu0 0.0
        %1455 = vmatpush1.msra.mxu0 0.0
        %1456 = vmatprep.subr.mxu0 0.0
        %1457 = vmatpush1.msra.mxu0 0.0
        %1458 = vmatprep.mubr.f32.mxu0 0.0
        %1459 = vmatmul.mubr.f32.gmra.mrb[0].mxu0 %v1389
        %v1460 = vpop.f32.mrb[0].mxu0
        %v1461 = vadd.f32 0.0, %v1460
        %v1462 = vpop.f32.mrb[0].mxu0
        %1463 = vmatprep.mubr.f32.mxu0 0.0
        %1464 = vmatmul.mubr.f32.gmra.mrb[0].mxu0 %v1392
        %v1465 = vpop.f32.mrb[0].mxu0
        %v1466 = vadd.f32 0.0, %v1465
        %v1467 = vpop.f32.mrb[0].mxu0
        %1468 = vdwg.mxu0
        %v1470 = vsel %vm1000, %v1182, 0
        %v1473 = vsel %vm1000, %v1187, 0
        %1475 = vmatprep.subr.mxu0 0.0
        %1476 = vmatpush1.msra.mxu0 %v1190
        %1477 = vmatprep.subr.mxu0 0.0
        %1478 = vmatpush1.msra.mxu0 0.0
        %1479 = vmatprep.subr.mxu0 0.0
        %1480 = vmatpush1.msra.mxu0 0.0
        %1481 = vmatprep.subr.mxu0 0.0
        %1482 = vmatpush1.msra.mxu0 0.0
        %1483 = vmatprep.subr.mxu0 0.0
        %1484 = vmatpush1.msra.mxu0 0.0
        %1485 = vmatprep.subr.mxu0 0.0
        %1486 = vmatpush1.msra.mxu0 0.0
        %1487 = vmatprep.subr.mxu0 0.0
        %1488 = vmatpush1.msra.mxu0 0.0
        %1489 = vmatprep.subr.mxu0 0.0
        %1490 = vmatpush1.msra.mxu0 0.0
        %1491 = vmatprep.subr.mxu0 0.0
        %1492 = vmatpush1.msra.mxu0 0.0
        %1493 = vmatprep.subr.mxu0 0.0
        %1494 = vmatpush1.msra.mxu0 0.0
        %1495 = vmatprep.subr.mxu0 0.0
        %1496 = vmatpush1.msra.mxu0 0.0
        %1497 = vmatprep.subr.mxu0 0.0
        %1498 = vmatpush1.msra.mxu0 0.0
        %1499 = vmatprep.subr.mxu0 0.0
        %1500 = vmatpush1.msra.mxu0 0.0
        %1501 = vmatprep.subr.mxu0 0.0
        %1502 = vmatpush1.msra.mxu0 0.0
        %1503 = vmatprep.subr.mxu0 0.0
        %1504 = vmatpush1.msra.mxu0 0.0
        %1505 = vmatprep.subr.mxu0 0.0
        %1506 = vmatpush1.msra.mxu0 0.0
        %1507 = vmatprep.subr.mxu0 0.0
        %1508 = vmatpush1.msra.mxu0 0.0
        %1509 = vmatprep.subr.mxu0 0.0
        %1510 = vmatpush1.msra.mxu0 0.0
        %1511 = vmatprep.subr.mxu0 0.0
        %1512 = vmatpush1.msra.mxu0 0.0
        %1513 = vmatprep.subr.mxu0 0.0
        %1514 = vmatpush1.msra.mxu0 0.0
        %1515 = vmatprep.subr.mxu0 0.0
        %1516 = vmatpush1.msra.mxu0 0.0
        %1517 = vmatprep.subr.mxu0 0.0
        %1518 = vmatpush1.msra.mxu0 0.0
        %1519 = vmatprep.subr.mxu0 0.0
        %1520 = vmatpush1.msra.mxu0 0.0
        %1521 = vmatprep.subr.mxu0 0.0
        %1522 = vmatpush1.msra.mxu0 0.0
        %1523 = vmatprep.subr.mxu0 0.0
        %1524 = vmatpush1.msra.mxu0 0.0
        %1525 = vmatprep.subr.mxu0 0.0
        %1526 = vmatpush1.msra.mxu0 0.0
        %1527 = vmatprep.subr.mxu0 0.0
        %1528 = vmatpush1.msra.mxu0 0.0
        %1529 = vmatprep.subr.mxu0 0.0
        %1530 = vmatpush1.msra.mxu0 0.0
        %1531 = vmatprep.subr.mxu0 0.0
        %1532 = vmatpush1.msra.mxu0 0.0
        %1533 = vmatprep.subr.mxu0 0.0
        %1534 = vmatpush1.msra.mxu0 0.0
        %1535 = vmatprep.subr.mxu0 0.0
        %1536 = vmatpush1.msra.mxu0 0.0
        %1537 = vmatprep.subr.mxu0 0.0
        %1538 = vmatpush1.msra.mxu0 0.0
        %1539 = vmatprep.mubr.f32.mxu0 0.0
        %1540 = vmatmul.mubr.f32.gmra.mrb[0].mxu0 %v1470
        %v1541 = vpop.f32.mrb[0].mxu0
        %v1542 = vadd.f32 %v1461, %v1541
        %v1543 = vpop.f32.mrb[0].mxu0
        %1544 = vmatprep.mubr.f32.mxu0 0.0
        %1545 = vmatmul.mubr.f32.gmra.mrb[0].mxu0 %v1473
        %v1546 = vpop.f32.mrb[0].mxu0
        %v1547 = vadd.f32 %v1466, %v1546
        %v1548 = vpop.f32.mrb[0].mxu0
        %1549 = vdwg.mxu0
        %1550 = vrot.lane.b32.xlu0 %v827, 112
        %v1551 = vpop.permute.xlu0 %1550
        %1552 = vrot.lane.b32.xlu0 %v832, 112
        %v1553 = vpop.permute.xlu0 %1552
        %1554 = vrot.lane.b32.xlu0 %v916, 112
        %v1555 = vpop.permute.xlu0 %1554
        %v1556 = vsel %vm1000, %v1551, 0
        %v1558 = vsel %vm1000, %v1553, 0
        %v1560 = vsel %vm1000, %v1555, 0
        %1562 = vmatprep.subr.mxu0 0.0
        %1563 = vmatpush1.xpose.msra.mxu0 %v1560
        %1564 = vmatprep.subr.mxu0 0.0
        %1565 = vmatpush1.xpose.msra.mxu0 0.0
        %1566 = vmatprep.subr.mxu0 0.0
        %1567 = vmatpush1.xpose.msra.mxu0 0.0
        %1568 = vmatprep.subr.mxu0 0.0
        %1569 = vmatpush1.xpose.msra.mxu0 0.0
        %1570 = vmatprep.subr.mxu0 0.0
        %1571 = vmatpush1.xpose.msra.mxu0 0.0
        %1572 = vmatprep.subr.mxu0 0.0
        %1573 = vmatpush1.xpose.msra.mxu0 0.0
        %1574 = vmatprep.subr.mxu0 0.0
        %1575 = vmatpush1.xpose.msra.mxu0 0.0
        %1576 = vmatprep.subr.mxu0 0.0
        %1577 = vmatpush1.xpose.msra.mxu0 0.0
        %1578 = vmatprep.subr.mxu0 0.0
        %1579 = vmatpush1.xpose.msra.mxu0 0.0
        %1580 = vmatprep.subr.mxu0 0.0
        %1581 = vmatpush1.xpose.msra.mxu0 0.0
        %1582 = vmatprep.subr.mxu0 0.0
        %1583 = vmatpush1.xpose.msra.mxu0 0.0
        %1584 = vmatprep.subr.mxu0 0.0
        %1585 = vmatpush1.xpose.msra.mxu0 0.0
        %1586 = vmatprep.subr.mxu0 0.0
        %1587 = vmatpush1.xpose.msra.mxu0 0.0
        %1588 = vmatprep.subr.mxu0 0.0
        %1589 = vmatpush1.xpose.msra.mxu0 0.0
        %1590 = vmatprep.subr.mxu0 0.0
        %1591 = vmatpush1.xpose.msra.mxu0 0.0
        %1592 = vmatprep.subr.mxu0 0.0
        %1593 = vmatpush1.xpose.msra.mxu0 0.0
        %1594 = vmatprep.subr.mxu0 0.0
        %1595 = vmatpush1.xpose.msra.mxu0 0.0
        %1596 = vmatprep.subr.mxu0 0.0
        %1597 = vmatpush1.xpose.msra.mxu0 0.0
        %1598 = vmatprep.subr.mxu0 0.0
        %1599 = vmatpush1.xpose.msra.mxu0 0.0
        %1600 = vmatprep.subr.mxu0 0.0
        %1601 = vmatpush1.xpose.msra.mxu0 0.0
        %1602 = vmatprep.subr.mxu0 0.0
        %1603 = vmatpush1.xpose.msra.mxu0 0.0
        %1604 = vmatprep.subr.mxu0 0.0
        %1605 = vmatpush1.xpose.msra.mxu0 0.0
        %1606 = vmatprep.subr.mxu0 0.0
        %1607 = vmatpush1.xpose.msra.mxu0 0.0
        %1608 = vmatprep.subr.mxu0 0.0
        %1609 = vmatpush1.xpose.msra.mxu0 0.0
        %1610 = vmatprep.subr.mxu0 0.0
        %1611 = vmatpush1.xpose.msra.mxu0 0.0
        %1612 = vmatprep.subr.mxu0 0.0
        %1613 = vmatpush1.xpose.msra.mxu0 0.0
        %1614 = vmatprep.subr.mxu0 0.0
        %1615 = vmatpush1.xpose.msra.mxu0 0.0
        %1616 = vmatprep.subr.mxu0 0.0
        %1617 = vmatpush1.xpose.msra.mxu0 0.0
        %1618 = vmatprep.subr.mxu0 0.0
        %1619 = vmatpush1.xpose.msra.mxu0 0.0
        %1620 = vmatprep.subr.mxu0 0.0
        %1621 = vmatpush1.xpose.msra.mxu0 0.0
        %1622 = vmatprep.subr.mxu0 0.0
        %1623 = vmatpush1.xpose.msra.mxu0 0.0
        %1624 = vmatprep.subr.mxu0 0.0
        %1625 = vmatpush1.xpose.msra.mxu0 0.0
        %1626 = vmatprep.mubr.f32.mxu0 0.0
        %1627 = vmatmul.mubr.f32.gmra.mrb[0].mxu0 %v1556
        %v1628 = vpop.f32.mrb[0].mxu0
        %v1629 = vadd.f32 0.0, %v1628
        %v1630 = vpop.f32.mrb[0].mxu0
        %1631 = vmatprep.mubr.f32.mxu0 0.0
        %1632 = vmatmul.mubr.f32.gmra.mrb[0].mxu0 %v1558
        %v1633 = vpop.f32.mrb[0].mxu0
        %v1634 = vadd.f32 0.0, %v1633
        %v1635 = vpop.f32.mrb[0].mxu0
        %1636 = vdwg.mxu0
        %v1637 = vmul.f32 %v1629, 0.35355338
        %v1638 = vmul.f32 %v1634, 0.35355338
        %v1639 = vsel %vm1000, %v1637, -inf
        %1640 = vmax.xlane.f32.xlu0 %v1639
        %v1641 = vpop.xlane.xlu0 %1640
        %v1642 = vsel %vm1000, %v1638, -inf
        %1643 = vmax.xlane.f32.xlu0 %v1642
        %v1644 = vpop.xlane.xlu0 %1643
        %v1645 = vsub.f32 %v1637, %v1641
        %v1646 = vsub.f32 %v1638, %v1644
        %v1647 = vmul.f32 %v1645, 1.442695
        %v1648 = vpow.pop %v1647
        %v1649 = vmul.f32 %v1646, 1.442695
        %v1650 = vpow.pop %v1649
        %v1651 = vsel %vm1000, %v1648, 0.0
        %1652 = vadd.xlane.f32.xlu0 %v1651
        %v1653 = vpop.xlane.xlu0 %1652
        %v1654 = vsel %vm1000, %v1650, 0.0
        %1655 = vadd.xlane.f32.xlu0 %v1654
        %v1656 = vpop.xlane.xlu0 %1655
        %v1657 = vrcp.pop %v1653
        %v1658 = vmul.f32 %v1648, %v1657
        %v1659 = vrcp.pop %v1656
        %v1660 = vmul.f32 %v1650, %v1659
        %1661 = vrot.lane.b32.xlu0 %v997, 112
        %v1662 = vpop.permute.xlu0 %1661
        %v1665 = vsel %vm1000, %v1658, 0
        %v1668 = vsel %vm1000, %v1660, 0
        %1670 = vmatprep.subr.mxu0 0.0
        %1671 = vmatpush1.msra.mxu0 %v1662
        %1672 = vmatprep.subr.mxu0 0.0
        %1673 = vmatpush1.msra.mxu0 0.0
        %1674 = vmatprep.subr.mxu0 0.0
        %1675 = vmatpush1.msra.mxu0 0.0
        %1676 = vmatprep.subr.mxu0 0.0
        %1677 = vmatpush1.msra.mxu0 0.0
        %1678 = vmatprep.subr.mxu0 0.0
        %1679 = vmatpush1.msra.mxu0 0.0
        %1680 = vmatprep.subr.mxu0 0.0
        %1681 = vmatpush1.msra.mxu0 0.0
        %1682 = vmatprep.subr.mxu0 0.0
        %1683 = vmatpush1.msra.mxu0 0.0
        %1684 = vmatprep.subr.mxu0 0.0
        %1685 = vmatpush1.msra.mxu0 0.0
        %1686 = vmatprep.subr.mxu0 0.0
        %1687 = vmatpush1.msra.mxu0 0.0
        %1688 = vmatprep.subr.mxu0 0.0
        %1689 = vmatpush1.msra.mxu0 0.0
        %1690 = vmatprep.subr.mxu0 0.0
        %1691 = vmatpush1.msra.mxu0 0.0
        %1692 = vmatprep.subr.mxu0 0.0
        %1693 = vmatpush1.msra.mxu0 0.0
        %1694 = vmatprep.subr.mxu0 0.0
        %1695 = vmatpush1.msra.mxu0 0.0
        %1696 = vmatprep.subr.mxu0 0.0
        %1697 = vmatpush1.msra.mxu0 0.0
        %1698 = vmatprep.subr.mxu0 0.0
        %1699 = vmatpush1.msra.mxu0 0.0
        %1700 = vmatprep.subr.mxu0 0.0
        %1701 = vmatpush1.msra.mxu0 0.0
        %1702 = vmatprep.subr.mxu0 0.0
        %1703 = vmatpush1.msra.mxu0 0.0
        %1704 = vmatprep.subr.mxu0 0.0
        %1705 = vmatpush1.msra.mxu0 0.0
        %1706 = vmatprep.subr.mxu0 0.0
        %1707 = vmatpush1.msra.mxu0 0.0
        %1708 = vmatprep.subr.mxu0 0.0
        %1709 = vmatpush1.msra.mxu0 0.0
        %1710 = vmatprep.subr.mxu0 0.0
        %1711 = vmatpush1.msra.mxu0 0.0
        %1712 = vmatprep.subr.mxu0 0.0
        %1713 = vmatpush1.msra.mxu0 0.0
        %1714 = vmatprep.subr.mxu0 0.0
        %1715 = vmatpush1.msra.mxu0 0.0
        %1716 = vmatprep.subr.mxu0 0.0
        %1717 = vmatpush1.msra.mxu0 0.0
        %1718 = vmatprep.subr.mxu0 0.0
        %1719 = vmatpush1.msra.mxu0 0.0
        %1720 = vmatprep.subr.mxu0 0.0
        %1721 = vmatpush1.msra.mxu0 0.0
        %1722 = vmatprep.subr.mxu0 0.0
        %1723 = vmatpush1.msra.mxu0 0.0
        %1724 = vmatprep.subr.mxu0 0.0
        %1725 = vmatpush1.msra.mxu0 0.0
        %1726 = vmatprep.subr.mxu0 0.0
        %1727 = vmatpush1.msra.mxu0 0.0
        %1728 = vmatprep.subr.mxu0 0.0
        %1729 = vmatpush1.msra.mxu0 0.0
        %1730 = vmatprep.subr.mxu0 0.0
        %1731 = vmatpush1.msra.mxu0 0.0
        %1732 = vmatprep.subr.mxu0 0.0
        %1733 = vmatpush1.msra.mxu0 0.0
        %1734 = vmatprep.mubr.f32.mxu0 0.0
        %1735 = vmatmul.mubr.f32.gmra.mrb[0].mxu0 %v1665
        %v1736 = vpop.f32.mrb[0].mxu0
        %v1737 = vadd.f32 0.0, %v1736
        %v1738 = vpop.f32.mrb[0].mxu0
        %1739 = vmatprep.mubr.f32.mxu0 0.0
        %1740 = vmatmul.mubr.f32.gmra.mrb[0].mxu0 %v1668
        %v1741 = vpop.f32.mrb[0].mxu0
        %v1742 = vadd.f32 0.0, %v1741
        %v1743 = vpop.f32.mrb[0].mxu0
        %1744 = vdwg.mxu0
        %v1745 = vld [vmem:[#allocation7 + $0x10] sm:$0xff]
        %v1747 = vsel %vm1000, %v1737, 0
        %v1750 = vsel %vm1000, %v1742, 0
        %1752 = vmatprep.subr.mxu0 0.0
        %1753 = vmatpush1.msra.mxu0 %v1745
        %1754 = vmatprep.subr.mxu0 0.0
        %1755 = vmatpush1.msra.mxu0 0.0
        %1756 = vmatprep.subr.mxu0 0.0
        %1757 = vmatpush1.msra.mxu0 0.0
        %1758 = vmatprep.subr.mxu0 0.0
        %1759 = vmatpush1.msra.mxu0 0.0
        %1760 = vmatprep.subr.mxu0 0.0
        %1761 = vmatpush1.msra.mxu0 0.0
        %1762 = vmatprep.subr.mxu0 0.0
        %1763 = vmatpush1.msra.mxu0 0.0
        %1764 = vmatprep.subr.mxu0 0.0
        %1765 = vmatpush1.msra.mxu0 0.0
        %1766 = vmatprep.subr.mxu0 0.0
        %1767 = vmatpush1.msra.mxu0 0.0
        %1768 = vmatprep.subr.mxu0 0.0
        %1769 = vmatpush1.msra.mxu0 0.0
        %1770 = vmatprep.subr.mxu0 0.0
        %1771 = vmatpush1.msra.mxu0 0.0
        %1772 = vmatprep.subr.mxu0 0.0
        %1773 = vmatpush1.msra.mxu0 0.0
        %1774 = vmatprep.subr.mxu0 0.0
        %1775 = vmatpush1.msra.mxu0 0.0
        %1776 = vmatprep.subr.mxu0 0.0
        %1777 = vmatpush1.msra.mxu0 0.0
        %1778 = vmatprep.subr.mxu0 0.0
        %1779 = vmatpush1.msra.mxu0 0.0
        %1780 = vmatprep.subr.mxu0 0.0
        %1781 = vmatpush1.msra.mxu0 0.0
        %1782 = vmatprep.subr.mxu0 0.0
        %1783 = vmatpush1.msra.mxu0 0.0
        %1784 = vmatprep.subr.mxu0 0.0
        %1785 = vmatpush1.msra.mxu0 0.0
        %1786 = vmatprep.subr.mxu0 0.0
        %1787 = vmatpush1.msra.mxu0 0.0
        %1788 = vmatprep.subr.mxu0 0.0
        %1789 = vmatpush1.msra.mxu0 0.0
        %1790 = vmatprep.subr.mxu0 0.0
        %1791 = vmatpush1.msra.mxu0 0.0
        %1792 = vmatprep.subr.mxu0 0.0
        %1793 = vmatpush1.msra.mxu0 0.0
        %1794 = vmatprep.subr.mxu0 0.0
        %1795 = vmatpush1.msra.mxu0 0.0
        %1796 = vmatprep.subr.mxu0 0.0
        %1797 = vmatpush1.msra.mxu0 0.0
        %1798 = vmatprep.subr.mxu0 0.0
        %1799 = vmatpush1.msra.mxu0 0.0
        %1800 = vmatprep.subr.mxu0 0.0
        %1801 = vmatpush1.msra.mxu0 0.0
        %1802 = vmatprep.subr.mxu0 0.0
        %1803 = vmatpush1.msra.mxu0 0.0
        %1804 = vmatprep.subr.mxu0 0.0
        %1805 = vmatpush1.msra.mxu0 0.0
        %1806 = vmatprep.subr.mxu0 0.0
        %1807 = vmatpush1.msra.mxu0 0.0
        %1808 = vmatprep.subr.mxu0 0.0
        %1809 = vmatpush1.msra.mxu0 0.0
        %1810 = vmatprep.subr.mxu0 0.0
        %1811 = vmatpush1.msra.mxu0 0.0
        %1812 = vmatprep.subr.mxu0 0.0
        %1813 = vmatpush1.msra.mxu0 0.0
        %1814 = vmatprep.subr.mxu0 0.0
        %1815 = vmatpush1.msra.mxu0 0.0
        %1816 = vmatprep.mubr.f32.mxu0 0.0
        %1817 = vmatmul.mubr.f32.gmra.mrb[0].mxu0 %v1747
        %v1818 = vpop.f32.mrb[0].mxu0
        %v1819 = vadd.f32 0.0, %v1818
        %v1820 = vpop.f32.mrb[0].mxu0
        %1821 = vmatprep.mubr.f32.mxu0 0.0
        %1822 = vmatmul.mubr.f32.gmra.mrb[0].mxu0 %v1750
        %v1823 = vpop.f32.mrb[0].mxu0
        %v1824 = vadd.f32 0.0, %v1823
        %v1825 = vpop.f32.mrb[0].mxu0
        %1826 = vdwg.mxu0
        %v1827 = vadd.f32 %v1542, %v1819
        %v1828 = vadd.f32 %v1547, %v1824
        %1829 = vrot.lane.b32.xlu0 %v827, 104
        %v1830 = vpop.permute.xlu0 %1829
        %1831 = vrot.lane.b32.xlu0 %v832, 104
        %v1832 = vpop.permute.xlu0 %1831
        %1833 = vrot.lane.b32.xlu0 %v916, 104
        %v1834 = vpop.permute.xlu0 %1833
        %v1835 = vsel %vm1000, %v1830, 0
        %v1837 = vsel %vm1000, %v1832, 0
        %v1839 = vsel %vm1000, %v1834, 0
        %1841 = vmatprep.subr.mxu0 0.0
        %1842 = vmatpush1.xpose.msra.mxu0 %v1839
        %1843 = vmatprep.subr.mxu0 0.0
        %1844 = vmatpush1.xpose.msra.mxu0 0.0
        %1845 = vmatprep.subr.mxu0 0.0
        %1846 = vmatpush1.xpose.msra.mxu0 0.0
        %1847 = vmatprep.subr.mxu0 0.0
        %1848 = vmatpush1.xpose.msra.mxu0 0.0
        %1849 = vmatprep.subr.mxu0 0.0
        %1850 = vmatpush1.xpose.msra.mxu0 0.0
        %1851 = vmatprep.subr.mxu0 0.0
        %1852 = vmatpush1.xpose.msra.mxu0 0.0
        %1853 = vmatprep.subr.mxu0 0.0
        %1854 = vmatpush1.xpose.msra.mxu0 0.0
        %1855 = vmatprep.subr.mxu0 0.0
        %1856 = vmatpush1.xpose.msra.mxu0 0.0
        %1857 = vmatprep.subr.mxu0 0.0
        %1858 = vmatpush1.xpose.msra.mxu0 0.0
        %1859 = vmatprep.subr.mxu0 0.0
        %1860 = vmatpush1.xpose.msra.mxu0 0.0
        %1861 = vmatprep.subr.mxu0 0.0
        %1862 = vmatpush1.xpose.msra.mxu0 0.0
        %1863 = vmatprep.subr.mxu0 0.0
        %1864 = vmatpush1.xpose.msra.mxu0 0.0
        %1865 = vmatprep.subr.mxu0 0.0
        %1866 = vmatpush1.xpose.msra.mxu0 0.0
        %1867 = vmatprep.subr.mxu0 0.0
        %1868 = vmatpush1.xpose.msra.mxu0 0.0
        %1869 = vmatprep.subr.mxu0 0.0
        %1870 = vmatpush1.xpose.msra.mxu0 0.0
        %1871 = vmatprep.subr.mxu0 0.0
        %1872 = vmatpush1.xpose.msra.mxu0 0.0
        %1873 = vmatprep.subr.mxu0 0.0
        %1874 = vmatpush1.xpose.msra.mxu0 0.0
        %1875 = vmatprep.subr.mxu0 0.0
        %1876 = vmatpush1.xpose.msra.mxu0 0.0
        %1877 = vmatprep.subr.mxu0 0.0
        %1878 = vmatpush1.xpose.msra.mxu0 0.0
        %1879 = vmatprep.subr.mxu0 0.0
        %1880 = vmatpush1.xpose.msra.mxu0 0.0
        %1881 = vmatprep.subr.mxu0 0.0
        %1882 = vmatpush1.xpose.msra.mxu0 0.0
        %1883 = vmatprep.subr.mxu0 0.0
        %1884 = vmatpush1.xpose.msra.mxu0 0.0
        %1885 = vmatprep.subr.mxu0 0.0
        %1886 = vmatpush1.xpose.msra.mxu0 0.0
        %1887 = vmatprep.subr.mxu0 0.0
        %1888 = vmatpush1.xpose.msra.mxu0 0.0
        %1889 = vmatprep.subr.mxu0 0.0
        %1890 = vmatpush1.xpose.msra.mxu0 0.0
        %1891 = vmatprep.subr.mxu0 0.0
        %1892 = vmatpush1.xpose.msra.mxu0 0.0
        %1893 = vmatprep.subr.mxu0 0.0
        %1894 = vmatpush1.xpose.msra.mxu0 0.0
        %1895 = vmatprep.subr.mxu0 0.0
        %1896 = vmatpush1.xpose.msra.mxu0 0.0
        %1897 = vmatprep.subr.mxu0 0.0
        %1898 = vmatpush1.xpose.msra.mxu0 0.0
        %1899 = vmatprep.subr.mxu0 0.0
        %1900 = vmatpush1.xpose.msra.mxu0 0.0
        %1901 = vmatprep.subr.mxu0 0.0
        %1902 = vmatpush1.xpose.msra.mxu0 0.0
        %1903 = vmatprep.subr.mxu0 0.0
        %1904 = vmatpush1.xpose.msra.mxu0 0.0
        %1905 = vmatprep.mubr.f32.mxu0 0.0
        %1906 = vmatmul.mubr.f32.gmra.mrb[0].mxu0 %v1835
        %v1907 = vpop.f32.mrb[0].mxu0
        %v1908 = vadd.f32 0.0, %v1907
        %v1909 = vpop.f32.mrb[0].mxu0
        %1910 = vmatprep.mubr.f32.mxu0 0.0
        %1911 = vmatmul.mubr.f32.gmra.mrb[0].mxu0 %v1837
        %v1912 = vpop.f32.mrb[0].mxu0
        %v1913 = vadd.f32 0.0, %v1912
        %v1914 = vpop.f32.mrb[0].mxu0
        %1915 = vdwg.mxu0
        %v1916 = vmul.f32 %v1908, 0.35355338
        %v1917 = vmul.f32 %v1913, 0.35355338
        %v1918 = vsel %vm1000, %v1916, -inf
        %1919 = vmax.xlane.f32.xlu0 %v1918
        %v1920 = vpop.xlane.xlu0 %1919
        %v1921 = vsel %vm1000, %v1917, -inf
        %1922 = vmax.xlane.f32.xlu0 %v1921
        %v1923 = vpop.xlane.xlu0 %1922
        %v1924 = vsub.f32 %v1916, %v1920
        %v1925 = vsub.f32 %v1917, %v1923
        %v1926 = vmul.f32 %v1924, 1.442695
        %v1927 = vpow.pop %v1926
        %v1928 = vmul.f32 %v1925, 1.442695
        %v1929 = vpow.pop %v1928
        %v1930 = vsel %vm1000, %v1927, 0.0
        %1931 = vadd.xlane.f32.xlu0 %v1930
        %v1932 = vpop.xlane.xlu0 %1931
        %v1933 = vsel %vm1000, %v1929, 0.0
        %1934 = vadd.xlane.f32.xlu0 %v1933
        %v1935 = vpop.xlane.xlu0 %1934
        %v1936 = vrcp.pop %v1932
        %v1937 = vmul.f32 %v1927, %v1936
        %v1938 = vrcp.pop %v1935
        %v1939 = vmul.f32 %v1929, %v1938
        %1940 = vrot.lane.b32.xlu0 %v997, 104
        %v1941 = vpop.permute.xlu0 %1940
        %v1944 = vsel %vm1000, %v1937, 0
        %v1947 = vsel %vm1000, %v1939, 0
        %1949 = vmatprep.subr.mxu0 0.0
        %1950 = vmatpush1.msra.mxu0 %v1941
        %1951 = vmatprep.subr.mxu0 0.0
        %1952 = vmatpush1.msra.mxu0 0.0
        %1953 = vmatprep.subr.mxu0 0.0
        %1954 = vmatpush1.msra.mxu0 0.0
        %1955 = vmatprep.subr.mxu0 0.0
        %1956 = vmatpush1.msra.mxu0 0.0
        %1957 = vmatprep.subr.mxu0 0.0
        %1958 = vmatpush1.msra.mxu0 0.0
        %1959 = vmatprep.subr.mxu0 0.0
        %1960 = vmatpush1.msra.mxu0 0.0
        %1961 = vmatprep.subr.mxu0 0.0
        %1962 = vmatpush1.msra.mxu0 0.0
        %1963 = vmatprep.subr.mxu0 0.0
        %1964 = vmatpush1.msra.mxu0 0.0
        %1965 = vmatprep.subr.mxu0 0.0
        %1966 = vmatpush1.msra.mxu0 0.0
        %1967 = vmatprep.subr.mxu0 0.0
        %1968 = vmatpush1.msra.mxu0 0.0
        %1969 = vmatprep.subr.mxu0 0.0
        %1970 = vmatpush1.msra.mxu0 0.0
        %1971 = vmatprep.subr.mxu0 0.0
        %1972 = vmatpush1.msra.mxu0 0.0
        %1973 = vmatprep.subr.mxu0 0.0
        %1974 = vmatpush1.msra.mxu0 0.0
        %1975 = vmatprep.subr.mxu0 0.0
        %1976 = vmatpush1.msra.mxu0 0.0
        %1977 = vmatprep.subr.mxu0 0.0
        %1978 = vmatpush1.msra.mxu0 0.0
        %1979 = vmatprep.subr.mxu0 0.0
        %1980 = vmatpush1.msra.mxu0 0.0
        %1981 = vmatprep.subr.mxu0 0.0
        %1982 = vmatpush1.msra.mxu0 0.0
        %1983 = vmatprep.subr.mxu0 0.0
        %1984 = vmatpush1.msra.mxu0 0.0
        %1985 = vmatprep.subr.mxu0 0.0
        %1986 = vmatpush1.msra.mxu0 0.0
        %1987 = vmatprep.subr.mxu0 0.0
        %1988 = vmatpush1.msra.mxu0 0.0
        %1989 = vmatprep.subr.mxu0 0.0
        %1990 = vmatpush1.msra.mxu0 0.0
        %1991 = vmatprep.subr.mxu0 0.0
        %1992 = vmatpush1.msra.mxu0 0.0
        %1993 = vmatprep.subr.mxu0 0.0
        %1994 = vmatpush1.msra.mxu0 0.0
        %1995 = vmatprep.subr.mxu0 0.0
        %1996 = vmatpush1.msra.mxu0 0.0
        %1997 = vmatprep.subr.mxu0 0.0
        %1998 = vmatpush1.msra.mxu0 0.0
        %1999 = vmatprep.subr.mxu0 0.0
        %2000 = vmatpush1.msra.mxu0 0.0
        %2001 = vmatprep.subr.mxu0 0.0
        %2002 = vmatpush1.msra.mxu0 0.0
        %2003 = vmatprep.subr.mxu0 0.0
        %2004 = vmatpush1.msra.mxu0 0.0
        %2005 = vmatprep.subr.mxu0 0.0
        %2006 = vmatpush1.msra.mxu0 0.0
        %2007 = vmatprep.subr.mxu0 0.0
        %2008 = vmatpush1.msra.mxu0 0.0
        %2009 = vmatprep.subr.mxu0 0.0
        %2010 = vmatpush1.msra.mxu0 0.0
        %2011 = vmatprep.subr.mxu0 0.0
        %2012 = vmatpush1.msra.mxu0 0.0
        %2013 = vmatprep.mubr.f32.mxu0 0.0
        %2014 = vmatmul.mubr.f32.gmra.mrb[0].mxu0 %v1944
        %v2015 = vpop.f32.mrb[0].mxu0
        %v2016 = vadd.f32 0.0, %v2015
        %v2017 = vpop.f32.mrb[0].mxu0
        %2018 = vmatprep.mubr.f32.mxu0 0.0
        %2019 = vmatmul.mubr.f32.gmra.mrb[0].mxu0 %v1947
        %v2020 = vpop.f32.mrb[0].mxu0
        %v2021 = vadd.f32 0.0, %v2020
        %v2022 = vpop.f32.mrb[0].mxu0
        %2023 = vdwg.mxu0
        %v2024 = vld [vmem:[#allocation7 + $0x18] sm:$0xff]
        %v2026 = vsel %vm1000, %v2016, 0
        %v2029 = vsel %vm1000, %v2021, 0
        %2031 = vmatprep.subr.mxu0 0.0
        %2032 = vmatpush1.msra.mxu0 %v2024
        %2033 = vmatprep.subr.mxu0 0.0
        %2034 = vmatpush1.msra.mxu0 0.0
        %2035 = vmatprep.subr.mxu0 0.0
        %2036 = vmatpush1.msra.mxu0 0.0
        %2037 = vmatprep.subr.mxu0 0.0
        %2038 = vmatpush1.msra.mxu0 0.0
        %2039 = vmatprep.subr.mxu0 0.0
        %2040 = vmatpush1.msra.mxu0 0.0
        %2041 = vmatprep.subr.mxu0 0.0
        %2042 = vmatpush1.msra.mxu0 0.0
        %2043 = vmatprep.subr.mxu0 0.0
        %2044 = vmatpush1.msra.mxu0 0.0
        %2045 = vmatprep.subr.mxu0 0.0
        %2046 = vmatpush1.msra.mxu0 0.0
        %2047 = vmatprep.subr.mxu0 0.0
        %2048 = vmatpush1.msra.mxu0 0.0
        %2049 = vmatprep.subr.mxu0 0.0
        %2050 = vmatpush1.msra.mxu0 0.0
        %2051 = vmatprep.subr.mxu0 0.0
        %2052 = vmatpush1.msra.mxu0 0.0
        %2053 = vmatprep.subr.mxu0 0.0
        %2054 = vmatpush1.msra.mxu0 0.0
        %2055 = vmatprep.subr.mxu0 0.0
        %2056 = vmatpush1.msra.mxu0 0.0
        %2057 = vmatprep.subr.mxu0 0.0
        %2058 = vmatpush1.msra.mxu0 0.0
        %2059 = vmatprep.subr.mxu0 0.0
        %2060 = vmatpush1.msra.mxu0 0.0
        %2061 = vmatprep.subr.mxu0 0.0
        %2062 = vmatpush1.msra.mxu0 0.0
        %2063 = vmatprep.subr.mxu0 0.0
        %2064 = vmatpush1.msra.mxu0 0.0
        %2065 = vmatprep.subr.mxu0 0.0
        %2066 = vmatpush1.msra.mxu0 0.0
        %2067 = vmatprep.subr.mxu0 0.0
        %2068 = vmatpush1.msra.mxu0 0.0
        %2069 = vmatprep.subr.mxu0 0.0
        %2070 = vmatpush1.msra.mxu0 0.0
        %2071 = vmatprep.subr.mxu0 0.0
        %2072 = vmatpush1.msra.mxu0 0.0
        %2073 = vmatprep.subr.mxu0 0.0
        %2074 = vmatpush1.msra.mxu0 0.0
        %2075 = vmatprep.subr.mxu0 0.0
        %2076 = vmatpush1.msra.mxu0 0.0
        %2077 = vmatprep.subr.mxu0 0.0
        %2078 = vmatpush1.msra.mxu0 0.0
        %2079 = vmatprep.subr.mxu0 0.0
        %2080 = vmatpush1.msra.mxu0 0.0
        %2081 = vmatprep.subr.mxu0 0.0
        %2082 = vmatpush1.msra.mxu0 0.0
        %2083 = vmatprep.subr.mxu0 0.0
        %2084 = vmatpush1.msra.mxu0 0.0
        %2085 = vmatprep.subr.mxu0 0.0
        %2086 = vmatpush1.msra.mxu0 0.0
        %2087 = vmatprep.subr.mxu0 0.0
        %2088 = vmatpush1.msra.mxu0 0.0
        %2089 = vmatprep.subr.mxu0 0.0
        %2090 = vmatpush1.msra.mxu0 0.0
        %2091 = vmatprep.subr.mxu0 0.0
        %2092 = vmatpush1.msra.mxu0 0.0
        %2093 = vmatprep.subr.mxu0 0.0
        %2094 = vmatpush1.msra.mxu0 0.0
        %2095 = vmatprep.mubr.f32.mxu0 0.0
        %2096 = vmatmul.mubr.f32.gmra.mrb[0].mxu0 %v2026
        %v2097 = vpop.f32.mrb[0].mxu0
        %v2098 = vadd.f32 0.0, %v2097
        %v2099 = vpop.f32.mrb[0].mxu0
        %2100 = vmatprep.mubr.f32.mxu0 0.0
        %2101 = vmatmul.mubr.f32.gmra.mrb[0].mxu0 %v2029
        %v2102 = vpop.f32.mrb[0].mxu0
        %v2103 = vadd.f32 0.0, %v2102
        %v2104 = vpop.f32.mrb[0].mxu0
        %2105 = vdwg.mxu0
        %v2106 = vadd.f32 %v1827, %v2098
        %v2107 = vadd.f32 %v1828, %v2103
        %v2108 = vld [vmem:[%s11] sm:$0x1]
        %v2110 = vlaneseq
        %v2111 = vshrl.u32 %v2110, 7
        %v2112 = vsub.s32 0, %v2111
        %v2113 = vrot.slane %v2108, %v2112
        %v2115 = vadd.f32 %v2106, %v2113
        %v2116 = vadd.f32 %v2107, %v2113
        %v2117 = vld [vmem:[%s12] sm:$0x1]
        %v2118 = vld [vmem:[%s13] sm:$0x1]
        %v2119 = vsel %vm714, %v2115, 0.0
        %2120 = vadd.xlane.f32.xlu0 %v2119
        %v2121 = vpop.xlane.xlu0 %2120
        %v2122 = vsel %vm714, %v2116, 0.0
        %2123 = vadd.xlane.f32.xlu0 %v2122
        %v2124 = vpop.xlane.xlu0 %2123
        %v2125 = vmul.f32 %v2121, %v718
        %v2126 = vmul.f32 %v2124, %v718
        %v2127 = vsub.f32 %v2115, %v2125
        %v2128 = vsub.f32 %v2116, %v2126
        %v2129 = vmul.f32 %v2127, %v2127
        %v2130 = vmul.f32 %v2128, %v2128
        %v2131 = vsel %vm714, %v2129, 0.0
        %2132 = vadd.xlane.f32.xlu0 %v2131
        %v2133 = vpop.xlane.xlu0 %2132
        %v2134 = vsel %vm714, %v2130, 0.0
        %2135 = vadd.xlane.f32.xlu0 %v2134
        %v2136 = vpop.xlane.xlu0 %2135
        %v2137 = vmul.f32 %v2133, %v718
        %v2138 = vmul.f32 %v2136, %v718
        %v2139 = vadd.f32 %v2137, 1e-05
        %v2140 = vadd.f32 %v2138, 1e-05
        %v2141 = vrsqrt.pop %v2139
        %v2142 = vrsqrt.pop %v2140
        %v2143 = vmul.f32 %v2127, %v2141
        %v2144 = vmul.f32 %v2128, %v2142
        %v2146 = vlaneseq
        %v2147 = vshrl.u32 %v2146, 7
        %v2148 = vsub.s32 0, %v2147
        %v2149 = vrot.slane %v2117, %v2148
        %v2151 = vmul.f32 %v2143, %v2149
        %v2152 = vmul.f32 %v2144, %v2149
        %v2154 = vlaneseq
        %v2155 = vshrl.u32 %v2154, 7
        %v2156 = vsub.s32 0, %v2155
        %v2157 = vrot.slane %v2118, %v2156
        %v2159 = vadd.f32 %v2151, %v2157
        %v2160 = vadd.f32 %v2152, %v2157
        %v2161 = vld [vmem:[#allocation8] sm:$0xff]
        %v2162 = vld [vmem:[#allocation8 + $0x8] sm:$0xff]
        %v2163 = vld [vmem:[#allocation8 + $0x10] sm:$0xff]
        %v2164 = vld [vmem:[#allocation8 + $0x18] sm:$0xff]
        %v2165 = vld [vmem:[%s15] sm:$0x1]
        %v2167 = vlaneseq
        %v2168 = vshrl.u32 %v2167, 7
        %v2169 = vsub.s32 0, %v2168
        %v2170 = vrot.slane %v2165, %v2169
        %v2173 = vsel %vm714, %v2159, 0
        %v2176 = vsel %vm714, %v2160, 0
        %2178 = vmatprep.subr.mxu0 0.0
        %2179 = vmatpush1.msra.mxu0 %v2161
        %2180 = vmatprep.subr.mxu0 0.0
        %2181 = vmatpush1.msra.mxu0 %v2162
        %2182 = vmatprep.subr.mxu0 0.0
        %2183 = vmatpush1.msra.mxu0 %v2163
        %2184 = vmatprep.subr.mxu0 0.0
        %2185 = vmatpush1.msra.mxu0 %v2164
        %2186 = vmatprep.subr.mxu0 0.0
        %2187 = vmatpush1.msra.mxu0 0.0
        %2188 = vmatprep.subr.mxu0 0.0
        %2189 = vmatpush1.msra.mxu0 0.0
        %2190 = vmatprep.subr.mxu0 0.0
        %2191 = vmatpush1.msra.mxu0 0.0
        %2192 = vmatprep.subr.mxu0 0.0
        %2193 = vmatpush1.msra.mxu0 0.0
        %2194 = vmatprep.subr.mxu0 0.0
        %2195 = vmatpush1.msra.mxu0 0.0
        %2196 = vmatprep.subr.mxu0 0.0
        %2197 = vmatpush1.msra.mxu0 0.0
        %2198 = vmatprep.subr.mxu0 0.0
        %2199 = vmatpush1.msra.mxu0 0.0
        %2200 = vmatprep.subr.mxu0 0.0
        %2201 = vmatpush1.msra.mxu0 0.0
        %2202 = vmatprep.subr.mxu0 0.0
        %2203 = vmatpush1.msra.mxu0 0.0
        %2204 = vmatprep.subr.mxu0 0.0
        %2205 = vmatpush1.msra.mxu0 0.0
        %2206 = vmatprep.subr.mxu0 0.0
        %2207 = vmatpush1.msra.mxu0 0.0
        %2208 = vmatprep.subr.mxu0 0.0
        %2209 = vmatpush1.msra.mxu0 0.0
        %2210 = vmatprep.subr.mxu0 0.0
        %2211 = vmatpush1.msra.mxu0 0.0
        %2212 = vmatprep.subr.mxu0 0.0
        %2213 = vmatpush1.msra.mxu0 0.0
        %2214 = vmatprep.subr.mxu0 0.0
        %2215 = vmatpush1.msra.mxu0 0.0
        %2216 = vmatprep.subr.mxu0 0.0
        %2217 = vmatpush1.msra.mxu0 0.0
        %2218 = vmatprep.subr.mxu0 0.0
        %2219 = vmatpush1.msra.mxu0 0.0
        %2220 = vmatprep.subr.mxu0 0.0
        %2221 = vmatpush1.msra.mxu0 0.0
        %2222 = vmatprep.subr.mxu0 0.0
        %2223 = vmatpush1.msra.mxu0 0.0
        %2224 = vmatprep.subr.mxu0 0.0
        %2225 = vmatpush1.msra.mxu0 0.0
        %2226 = vmatprep.subr.mxu0 0.0
        %2227 = vmatpush1.msra.mxu0 0.0
        %2228 = vmatprep.subr.mxu0 0.0
        %2229 = vmatpush1.msra.mxu0 0.0
        %2230 = vmatprep.subr.mxu0 0.0
        %2231 = vmatpush1.msra.mxu0 0.0
        %2232 = vmatprep.subr.mxu0 0.0
        %2233 = vmatpush1.msra.mxu0 0.0
        %2234 = vmatprep.subr.mxu0 0.0
        %2235 = vmatpush1.msra.mxu0 0.0
        %2236 = vmatprep.subr.mxu0 0.0
        %2237 = vmatpush1.msra.mxu0 0.0
        %2238 = vmatprep.subr.mxu0 0.0
        %2239 = vmatpush1.msra.mxu0 0.0
        %2240 = vmatprep.subr.mxu0 0.0
        %2241 = vmatpush1.msra.mxu0 0.0
        %2242 = vmatprep.mubr.f32.mxu0 0.0
        %2243 = vmatmul.mubr.f32.gmra.mrb[0].mxu0 %v2173
        %v2244 = vpop.f32.mrb[0].mxu0
        %v2245 = vadd.f32 %v2170, %v2244
        %v2246 = vpop.f32.mrb[0].mxu0
        %2247 = vmatprep.mubr.f32.mxu0 0.0
        %2248 = vmatmul.mubr.f32.gmra.mrb[0].mxu0 %v2176
        %v2249 = vpop.f32.mrb[0].mxu0
        %v2250 = vadd.f32 %v2170, %v2249
        %v2251 = vpop.f32.mrb[0].mxu0
        %2252 = vdwg.mxu0
        %v2253 = vmax.f32 %v2245, 0.0
        %v2254 = vmax.f32 %v2250, 0.0
        %v2255 = vld [vmem:[%s16] sm:$0xff]
        %v2256 = vld [vmem:[%s16 + $0x8] sm:$0xff]
        %v2257 = vld [vmem:[%s16 + $0x10] sm:$0xff]
        %v2258 = vld [vmem:[%s16 + $0x18] sm:$0xff]
        %v2259 = vld [vmem:[%s16 + $0x20] sm:$0xff]
        %v2260 = vld [vmem:[%s16 + $0x28] sm:$0xff]
        %v2261 = vld [vmem:[%s16 + $0x30] sm:$0xff]
        %v2262 = vld [vmem:[%s16 + $0x38] sm:$0xff]
        %v2263 = vld [vmem:[%s17] sm:$0x1]
        %v2265 = vlaneseq
        %v2266 = vshrl.u32 %v2265, 7
        %v2267 = vsub.s32 0, %v2266
        %v2268 = vrot.slane %v2263, %v2267
        %vm2270 = vcmask 523264
        %v2272 = vsel %vm2270, %v2253, 0
        %v2275 = vsel %vm2270, %v2254, 0
        %2277 = vmatprep.subr.mxu0 0.0
        %2278 = vmatpush1.msra.mxu0 %v2255
        %2279 = vmatprep.subr.mxu0 0.0
        %2280 = vmatpush1.msra.mxu0 %v2256
        %2281 = vmatprep.subr.mxu0 0.0
        %2282 = vmatpush1.msra.mxu0 %v2257
        %2283 = vmatprep.subr.mxu0 0.0
        %2284 = vmatpush1.msra.mxu0 %v2258
        %2285 = vmatprep.subr.mxu0 0.0
        %2286 = vmatpush1.msra.mxu0 %v2259
        %2287 = vmatprep.subr.mxu0 0.0
        %2288 = vmatpush1.msra.mxu0 %v2260
        %2289 = vmatprep.subr.mxu0 0.0
        %2290 = vmatpush1.msra.mxu0 %v2261
        %2291 = vmatprep.subr.mxu0 0.0
        %2292 = vmatpush1.msra.mxu0 %v2262
        %2293 = vmatprep.subr.mxu0 0.0
        %2294 = vmatpush1.msra.mxu0 0.0
        %2295 = vmatprep.subr.mxu0 0.0
        %2296 = vmatpush1.msra.mxu0 0.0
        %2297 = vmatprep.subr.mxu0 0.0
        %2298 = vmatpush1.msra.mxu0 0.0
        %2299 = vmatprep.subr.mxu0 0.0
        %2300 = vmatpush1.msra.mxu0 0.0
        %2301 = vmatprep.subr.mxu0 0.0
        %2302 = vmatpush1.msra.mxu0 0.0
        %2303 = vmatprep.subr.mxu0 0.0
        %2304 = vmatpush1.msra.mxu0 0.0
        %2305 = vmatprep.subr.mxu0 0.0
        %2306 = vmatpush1.msra.mxu0 0.0
        %2307 = vmatprep.subr.mxu0 0.0
        %2308 = vmatpush1.msra.mxu0 0.0
        %2309 = vmatprep.subr.mxu0 0.0
        %2310 = vmatpush1.msra.mxu0 0.0
        %2311 = vmatprep.subr.mxu0 0.0
        %2312 = vmatpush1.msra.mxu0 0.0
        %2313 = vmatprep.subr.mxu0 0.0
        %2314 = vmatpush1.msra.mxu0 0.0
        %2315 = vmatprep.subr.mxu0 0.0
        %2316 = vmatpush1.msra.mxu0 0.0
        %2317 = vmatprep.subr.mxu0 0.0
        %2318 = vmatpush1.msra.mxu0 0.0
        %2319 = vmatprep.subr.mxu0 0.0
        %2320 = vmatpush1.msra.mxu0 0.0
        %2321 = vmatprep.subr.mxu0 0.0
        %2322 = vmatpush1.msra.mxu0 0.0
        %2323 = vmatprep.subr.mxu0 0.0
        %2324 = vmatpush1.msra.mxu0 0.0
        %2325 = vmatprep.subr.mxu0 0.0
        %2326 = vmatpush1.msra.mxu0 0.0
        %2327 = vmatprep.subr.mxu0 0.0
        %2328 = vmatpush1.msra.mxu0 0.0
        %2329 = vmatprep.subr.mxu0 0.0
        %2330 = vmatpush1.msra.mxu0 0.0
        %2331 = vmatprep.subr.mxu0 0.0
        %2332 = vmatpush1.msra.mxu0 0.0
        %2333 = vmatprep.subr.mxu0 0.0
        %2334 = vmatpush1.msra.mxu0 0.0
        %2335 = vmatprep.subr.mxu0 0.0
        %2336 = vmatpush1.msra.mxu0 0.0
        %2337 = vmatprep.subr.mxu0 0.0
        %2338 = vmatpush1.msra.mxu0 0.0
        %2339 = vmatprep.subr.mxu0 0.0
        %2340 = vmatpush1.msra.mxu0 0.0
        %2341 = vmatprep.mubr.f32.mxu0 0.0
        %2342 = vmatmul.mubr.f32.gmra.mrb[0].mxu0 %v2272
        %v2343 = vpop.f32.mrb[0].mxu0
        %v2344 = vadd.f32 %v2268, %v2343
        %v2345 = vpop.f32.mrb[0].mxu0
        %2346 = vmatprep.mubr.f32.mxu0 0.0
        %2347 = vmatmul.mubr.f32.gmra.mrb[0].mxu0 %v2275
        %v2348 = vpop.f32.mrb[0].mxu0
        %v2349 = vadd.f32 %v2268, %v2348
        %v2350 = vpop.f32.mrb[0].mxu0
        %2351 = vdwg.mxu0
        %v2352 = vld [vmem:[%s18] sm:$0x1]
        %v2353 = vld [vmem:[%s19] sm:$0x1]
        %v2354 = vsel %vm714, %v2344, 0.0
        %2355 = vadd.xlane.f32.xlu0 %v2354
        %v2356 = vpop.xlane.xlu0 %2355
        %v2357 = vsel %vm714, %v2349, 0.0
        %2358 = vadd.xlane.f32.xlu0 %v2357
        %v2359 = vpop.xlane.xlu0 %2358
        %v2360 = vmul.f32 %v2356, %v718
        %v2361 = vmul.f32 %v2359, %v718
        %v2362 = vsub.f32 %v2344, %v2360
        %v2363 = vsub.f32 %v2349, %v2361
        %v2364 = vmul.f32 %v2362, %v2362
        %v2365 = vmul.f32 %v2363, %v2363
        %v2366 = vsel %vm714, %v2364, 0.0
        %2367 = vadd.xlane.f32.xlu0 %v2366
        %v2368 = vpop.xlane.xlu0 %2367
        %v2369 = vsel %vm714, %v2365, 0.0
        %2370 = vadd.xlane.f32.xlu0 %v2369
        %v2371 = vpop.xlane.xlu0 %2370
        %v2372 = vmul.f32 %v2368, %v718
        %v2373 = vmul.f32 %v2371, %v718
        %v2374 = vadd.f32 %v2372, 1e-05
        %v2375 = vadd.f32 %v2373, 1e-05
        %v2376 = vrsqrt.pop %v2374
        %v2377 = vrsqrt.pop %v2375
        %v2378 = vmul.f32 %v2362, %v2376
        %v2379 = vmul.f32 %v2363, %v2377
        %v2381 = vlaneseq
        %v2382 = vshrl.u32 %v2381, 7
        %v2383 = vsub.s32 0, %v2382
        %v2384 = vrot.slane %v2352, %v2383
        %v2386 = vmul.f32 %v2378, %v2384
        %v2387 = vmul.f32 %v2379, %v2384
        %v2389 = vlaneseq
        %v2390 = vshrl.u32 %v2389, 7
        %v2391 = vsub.s32 0, %v2390
        %v2392 = vrot.slane %v2353, %v2391
        %v2394 = vadd.f32 %v2386, %v2392
        %v2395 = vadd.f32 %v2387, %v2392
        %2396 = vst.msk [vmem:[%s703] sm:$0xff] %vm714, %v2394
        %2397 = vst.msk [vmem:[%s703 + $0x8] sm:$0xff] %vm714, %v2395
        %s2398 = sand.u32 %s477, 1
        %s2399 = scalar_lea.sflag [#allocation4], %s2398
        %s2400 = sand.u32 %s477, 1
        %s2401 = smul.addr %s2400, 16
        %s2402 = scalar_lea.vmem [#allocation10], %s2401
        // Predicated region
        $region117: #{backward_cross_attention.1} parent=99 // pred_check
          %p2403 = pneg %p487
        $region118: #{backward_cross_attention.1} parent=99 // pred_check_branch
          %2405 = sbr.rel (%p2403) target = $region120
        $region119: #{backward_cross_attention.1} parent=99 // pred_region
          %s2407 = ssub.s32 256, 256
          %2408 = vsyncadd %s2399, %s2407
          %s2409 = smul.addr %s39, 2
          %s2410 = smul.addr %s2409, 128
          %s2411 = scalar_lea.hbm %s20, %s2410
          %s2412 = sshll.u32 %s2402, 4
          %s2413 = int_to_ptr.vmem [resolvable:$true] %s2412
          %2418 = dma.vmem_to_hbm [thread:$0]  %s2413, 256, %s2411, %s2399, 128, 128, 8
        $region120: #{backward_cross_attention.1} parent=99 // pred_fallthru
          _
      $region100: #{backward_cross_attention.1} parent=5 // pred_fallthru
        _
      %p2419 = scmp.le.s32.totalorder 2, %s34
      // Predicated region
      $region121: #{backward_cross_attention.1} parent=5 // pred_check
        %p2420 = pneg %p2419
      $region122: #{backward_cross_attention.1} parent=5 // pred_check_branch
        %2422 = sbr.rel (%p2420) target = $region124
      $region123: #{backward_cross_attention.1} parent=5 // pred_region
        %s2423 = ssub.s32 %s34, 2
        // Predicated region
        $region125: #{backward_cross_attention.1} parent=123 // pred_check
          %p2424 = pneg %p493
        $region126: #{backward_cross_attention.1} parent=123 // pred_check_branch
          %2426 = sbr.rel (%p2424) target = $region128
        $region127: #{backward_cross_attention.1} parent=123 // pred_region
          %s2427 = sand.u32 %s478, 1
          %s2428 = scalar_lea.sflag [#allocation4], %s2427
          %s2429 = sand.u32 %s478, 1
          %s2430 = smul.addr %s2429, 16
          %s2431 = scalar_lea.vmem [#allocation10], %s2430
          %2432 = dma.done %s2428, 256
        $region128: #{backward_cross_attention.1} parent=123 // pred_fallthru
          _
      $region124: #{backward_cross_attention.1} parent=5 // pred_fallthru
        _
    $region6: #{backward_cross_attention.1} parent=1 // loop_footer
      %s38 = sadd.s32 1, %s34
    $region7: #{backward_cross_attention.1} parent=1 // loop_footer_branch
      %33 = sbr.rel target = $region3
    $region8: #{backward_cross_attention.1} parent=1 // loop_exit
      _
    %2433 = vsyncpa [#allocation3], 1
    %s2434 = scalar_lea.sflag [#allocation3], 1
    %2435 = vsyncpa %s2434, 1
    %2436 = vsyncpa [#allocation6], 1
    %2437 = vsyncpa [#allocation9], 1
    %2438 = vsyncpa [#allocation4], 1
    %s2439 = scalar_lea.sflag [#allocation4], 1
    %2440 = vsyncpa %s2439, 1

</llo_original>
